<compile_context>
chip_gen: v5e
topology: v5e:2x2
jax: 0.10.0
libtpu: 0.0.40
codegen_flags: <defaults>
</compile_context>

<pallas_src>
import functools

import jax
import jax.numpy as jnp
from jax.experimental import pallas as pl
from jax.experimental.pallas import tpu as pltpu


def _round_up(x, m):
    return ((x + m - 1) // m) * m


# --------------------------------------------------------------------------- #
# Kernel
# --------------------------------------------------------------------------- #
def _gconv_kernel(num_supports, max_diffusion_step, input_size,
                  x_ref, supT_ref, w_ref, b_ref, out_ref, xs_ref):
    """One batch tile.

    x_ref   : (TB*F, Np)    bf16  rows = (batch, feature), lanes = padded nodes
    supT_ref: (S, Np, Np)   bf16  transposed, zero-padded diffusion supports
    w_ref   : (O, M*F)      bf16  W_re[o, m*F + f] = weight[f*M + m, o]
    b_ref   : (O, 1)        f32
    out_ref : (TB, O, Np)   f32   lane-dense stores (trailing dim % 128 == 0)
    xs_ref  : (M, TB*F, Np) bf16  VMEM scratch holding the Chebyshev terms
    """
    F = input_size
    M = xs_ref.shape[0]
    TB = out_ref.shape[0]
    n_pad = out_ref.shape[2]

    # ---- Chebyshev diffusion: 2-D MXU matmuls, contraction = padded nodes ----
    x0 = x_ref[...]                                        # (TB*F, Np) bf16
    xs_ref[0] = x0

    if max_diffusion_step > 0:
        # f32 carry for the recursion (x_{k-2}); one bf16 cast per term.
        x0_f32 = x0.astype(jnp.float32)
        for s in range(num_supports):
            supT = supT_ref[s]                             # (Np, Np) bf16
            xk1 = jnp.dot(x0, supT, preferred_element_type=jnp.float32)
            xk1_bf = xk1.astype(x0.dtype)
            xs_ref[s * max_diffusion_step + 1] = xk1_bf
            xk2 = x0_f32
            for k in range(2, max_diffusion_step + 1):
                # x_k = 2 * x_{k-1} @ support^T - x_{k-2}
                xk = 2.0 * jnp.dot(xk1_bf, supT,
                                   preferred_element_type=jnp.float32) - xk2
                xk_bf = xk.astype(x0.dtype)
                xs_ref[s * max_diffusion_step + k] = xk_bf
                xk2, xk1 = xk1, xk
                xk1_bf = xk_bf

    # ---- fused projection, transposed so the output store is lane-dense ----
    w = w_ref[...]                                         # (O, M*F) bf16
    bias = b_ref[...]                                      # (O, 1)   f32
    for b in range(TB):                                    # TB is small -> unrolled
        # rows (m, f) of the fused contraction for batch element b
        rhs = xs_ref[:, b * F:(b + 1) * F, :].reshape(M * F, n_pad)
        acc = jnp.dot(w, rhs, preferred_element_type=jnp.float32)   # (O, Np)
        out_ref[b] = (acc + bias).astype(out_ref.dtype)


# --------------------------------------------------------------------------- #
# Tile selection / call construction
# --------------------------------------------------------------------------- #
_VMEM_BUDGET = 24 * 1024 * 1024          # headroom under the 32 MiB scoped limit


def _vmem_estimate(tb, F, O, M, n_pad, S, single_buffer_invariants):
    inv = 1 if single_buffer_invariants else 2
    x_tile = 2 * tb * F * n_pad * 2                  # bf16 input tile, 2 buffers
    out_tile = 2 * tb * O * n_pad * 4                # f32 output tile, 2 buffers
    sup = inv * S * n_pad * n_pad * 2                # resident supports^T
    w = inv * O * M * F * 2                          # resident weight
    scratch = M * tb * F * n_pad * 2                 # Chebyshev term scratch
    live = 3 * tb * F * n_pad * 4                    # f32 recursion temporaries
    return x_tile + out_tile + sup + w + scratch + live


def _pick_batch_tile(B, F, O, M, n_pad, S):
    divisors = [d for d in range(B, 0, -1) if B % d == 0]

    def legal(tb):
        aligned = (tb == B) or ((tb * F) % 8 == 0)   # (8,128) block constraint
        return aligned and _vmem_estimate(tb, F, O, M, n_pad, S, True) <= _VMEM_BUDGET

    fitting = [d for d in divisors if legal(d)]
    if not fitting:
        return divisors[-1]                          # best effort: smallest tile
    multi = [d for d in fitting if d < B]            # gives >= 2 grid tiles
    if B >= 16 and multi:
        return multi[0]                              # v7x: feed both TensorCores
    return fitting[0]                                # v5e/v6e: one big tile


def _build_call(B, TB, F, O, M, S, n_pad, max_diffusion_step,
                single_buffer_invariants):
    def inv_spec(shape):
        ndim = len(shape)
        index_map = lambda i, _n=ndim: (0,) * _n
        if single_buffer_invariants:
            # constant index_map -> the second pipeline buffer is dead VMEM
            return pl.BlockSpec(shape, index_map, pipeline_mode=pl.Buffered(1))
        return pl.BlockSpec(shape, index_map)

    kernel = functools.partial(_gconv_kernel, S, max_diffusion_step, F)
    return pl.pallas_call(
        kernel,
        grid=(B // TB,),
        out_shape=jax.ShapeDtypeStruct((B, O, n_pad), jnp.float32),
        in_specs=[
            pl.BlockSpec((TB * F, n_pad), lambda i: (i, 0)),   # streamed x tile
            inv_spec((S, n_pad, n_pad)),                       # resident supports^T
            inv_spec((O, M * F)),                              # resident weight
            inv_spec((O, 1)),                                  # resident bias
        ],
        out_specs=pl.BlockSpec((TB, O, n_pad), lambda i: (i, 0, 0)),
        scratch_shapes=[pltpu.VMEM((M, TB * F, n_pad), jnp.bfloat16)],
        compiler_params=pltpu.CompilerParams(
            dimension_semantics=("parallel",),        # split batch tiles (v7x)
            vmem_limit_bytes=32 * 1024 * 1024,
        ),
    )


# --------------------------------------------------------------------------- #
# Wrapper
# --------------------------------------------------------------------------- #
def gconv_forward(inputs, state, supports, weight, biases,
                  num_nodes, max_diffusion_step, output_dim, batch_tile=None):
    """Pallas implementation of GCONV.forward.

    inputs : (B, num_nodes * input_dim)
    state  : (B, num_nodes * hid_dim)
    returns: (B, num_nodes * output_dim)
    """
    B = inputs.shape[0]
    N = num_nodes
    inputs = inputs.reshape(B, N, -1)
    state = state.reshape(B, N, -1)
    x_bnf = jnp.concatenate([inputs, state], axis=2)           # (B, N, F)
    F = x_bnf.shape[2]
    S = supports.shape[0]
    M = S * max_diffusion_step + 1
    O = output_dim
    assert weight.shape == (F * M, O)

    n_pad = _round_up(N, 128)                                  # lane / MXU granule

    # ---- batch-tile selection ----
    if batch_tile is not None and B % batch_tile == 0 and \
            (batch_tile == B or (batch_tile * F) % 8 == 0):
        TB = batch_tile
    else:
        TB = _pick_batch_tile(B, F, O, M, n_pad, S)

    # ---- layout plumbing (pure relayout; the heavy work happens in-kernel) ----
    # x: (B, N, F) -> rows (b, f), lanes = zero-padded nodes, bf16 for the MXU
    x_bfn = jnp.transpose(x_bnf, (0, 2, 1))                    # (B, F, N)
    x_bfn = jnp.pad(x_bfn, ((0, 0), (0, 0), (0, n_pad - N)))
    x2d = x_bfn.reshape(B * F, n_pad).astype(jnp.bfloat16)

    # supports: transposed so the diffusion is x @ support^T, zero-padded to Np
    supT = jnp.transpose(supports, (0, 2, 1))
    supT = jnp.pad(supT, ((0, 0), (0, n_pad - N), (0, n_pad - N)))
    supT = supT.astype(jnp.bfloat16)

    # weight: torch row f*M + m  ->  kernel column m*F + f, stored as (O, M*F)
    w_re = jnp.transpose(weight.reshape(F, M, O), (2, 1, 0)).reshape(O, M * F)
    w_re = w_re.astype(jnp.bfloat16)
    bias2d = biases.reshape(O, 1).astype(jnp.float32)

    args = (x2d, supT, w_re, bias2d)
    try:
        call = _build_call(B, TB, F, O, M, S, n_pad, max_diffusion_step, True)
        out_pad = call(*args)
    except Exception:
        # pipeline_mode=pl.Buffered(1) unsupported on this jax/libtpu -> default
        call = _build_call(B, TB, F, O, M, S, n_pad, max_diffusion_step, False)
        out_pad = call(*args)

    out = out_pad[:, :, :N]                                    # (B, O, N)
    out = jnp.transpose(out, (0, 2, 1))                        # (B, N, O)
    return out.reshape(B, N * O)


# --------------------------------------------------------------------------- #
# Pure-JAX reference (f32 transcription of the torch forward, dense supports)
# --------------------------------------------------------------------------- #
def gconv_reference(inputs, state, supports, weight, biases,
                    num_nodes, max_diffusion_step, output_dim):
    B = inputs.shape[0]
    N = num_nodes
    x = jnp.concatenate([inputs.reshape(B, N, -1), state.reshape(B, N, -1)], axis=2)
    F = x.shape[2]
    x0 = jnp.transpose(x, (1, 2, 0)).reshape(N, F * B)
    xs = [x0]
    if max_diffusion_step > 0:
        for s in range(supports.shape[0]):
            sup = supports[s]
            x1 = sup @ x0
            xs.append(x1)
            xk_1, xk_2 = x1, x0
            for _k in range(2, max_diffusion_step + 1):
                x2 = 2.0 * (sup @ xk_1) - xk_2
                xs.append(x2)
                xk_1, xk_2 = x2, xk_1
    M = len(xs)
    xcat = jnp.stack(xs, axis=0).reshape(M, N, F, B)
    xcat = jnp.transpose(xcat, (3, 1, 2, 0)).reshape(B * N, F * M)
    out = xcat @ weight + biases
    return out.reshape(B, N * output_dim)


# --------------------------------------------------------------------------- #
# Harness
# --------------------------------------------------------------------------- #
if __name__ == "__main__":
    batch = 16
    num_nodes = 16
    input_dim = 2
    hid_dim = 6
    output_dim = 8
    max_diffusion_step = 2
    num_supports = 2

    input_size = input_dim + hid_dim
    num_matrices = num_supports * max_diffusion_step + 1

    key = jax.random.PRNGKey(0)
    k_in, k_st, k_adj, k_w = jax.random.split(key, 4)

    inputs = jax.random.normal(k_in, (batch, num_nodes * input_dim), dtype=jnp.float32)
    state = jax.random.normal(k_st, (batch, num_nodes * hid_dim), dtype=jnp.float32)

    # deterministic dense "sparse" supports: forward / backward random-walk matrices
    adj = jax.random.uniform(k_adj, (num_nodes, num_nodes), dtype=jnp.float32)
    adj = adj * (adj > 0.5)
    adj = adj + jnp.eye(num_nodes, dtype=jnp.float32)
    rw_fwd = adj / jnp.sum(adj, axis=1, keepdims=True)
    rw_bwd = adj.T / jnp.sum(adj.T, axis=1, keepdims=True)
    supports = jnp.stack([rw_fwd, rw_bwd], axis=0)             # (S, N, N)

    # xavier_normal_ on weight of shape (input_size * num_matrices, output_dim)
    w_shape = (input_size * num_matrices, output_dim)
    std = (2.0 / (w_shape[0] + w_shape[1])) ** 0.5
    weight = std * jax.random.normal(k_w, w_shape, dtype=jnp.float32)
    biases = jnp.zeros((output_dim,), dtype=jnp.float32)       # bias_start = 0.0

    out = gconv_forward(inputs, state, supports, weight, biases,
                        num_nodes, max_diffusion_step, output_dim)
    out = jax.block_until_ready(out)

    ref = gconv_reference(inputs, state, supports, weight, biases,
                          num_nodes, max_diffusion_step, output_dim)
    assert out.shape == (batch, num_nodes * output_dim)
    # bf16 MXU inputs with f32 accumulation -> bf16-appropriate tolerance
    assert jnp.allclose(out, ref, rtol=5e-2, atol=1e-1), "mismatch vs reference"

    print("KERNEL_OK")
</pallas_src>

<mosaic_0001>
module attributes {stable_mosaic.version = 11 : i64} {
  func.func @_gconv_kernel(%arg0: i32, %arg1: memref<64x128xbf16, #tpu.memory_space<vmem>>, %arg2: memref<2x128x128xbf16, #tpu.memory_space<vmem>>, %arg3: memref<8x40xbf16, #tpu.memory_space<vmem>>, %arg4: memref<8x1xf32, #tpu.memory_space<vmem>>, %arg5: memref<8x8x128xf32, #tpu.memory_space<vmem>>, %arg6: memref<5x64x128xbf16, #tpu.memory_space<vmem>>) attributes {dimension_semantics = [#tpu.dimension_semantics<parallel>], iteration_bounds = array<i64: 2>, scalar_prefetch = 0 : i64, scratch_operands = 1 : i64, tpu.core_type = #tpu.core_type<tc>, window_params = [{transform_indices = @transform_0, window_bounds = array<i64: 64, 128>}, {pipeline_mode = #tpu.pipeline_mode<synchronous>, transform_indices = @transform_1, window_bounds = array<i64: 2, 128, 128>}, {pipeline_mode = #tpu.pipeline_mode<synchronous>, transform_indices = @transform_2, window_bounds = array<i64: 8, 40>}, {pipeline_mode = #tpu.pipeline_mode<synchronous>, transform_indices = @transform_3, window_bounds = array<i64: 8, 1>}, {transform_indices = @transform_4, window_bounds = array<i64: 8, 8, 128>}]} {
    %c0 = arith.constant 0 : index
    %c0_0 = arith.constant 0 : index
    %0 = vector.load %arg1[%c0, %c0_0] : memref<64x128xbf16, #tpu.memory_space<vmem>>, vector<64x128xbf16>
    %c0_1 = arith.constant 0 : index
    %c0_2 = arith.constant 0 : index
    %c0_3 = arith.constant 0 : index
    %1 = vector.load %arg6[%c0_1, %c0_2, %c0_3] : memref<5x64x128xbf16, #tpu.memory_space<vmem>>, vector<1x64x128xbf16>
    %2 = vector.shape_cast %1 : vector<1x64x128xbf16> to vector<64x128xbf16>
    %3 = vector.shape_cast %0 : vector<64x128xbf16> to vector<1x64x128xbf16>
    tpu.vector_store %arg6[%c0_1, %c0_2, %c0_3], %3 {strides = array<i32>} : memref<5x64x128xbf16, #tpu.memory_space<vmem>>, vector<1x64x128xbf16>,
    %4 = arith.extf %0 : vector<64x128xbf16> to vector<64x128xf32>
    %c0_4 = arith.constant 0 : index
    %c0_5 = arith.constant 0 : index
    %c0_6 = arith.constant 0 : index
    %5 = vector.load %arg2[%c0_4, %c0_5, %c0_6] : memref<2x128x128xbf16, #tpu.memory_space<vmem>>, vector<1x128x128xbf16>
    %6 = vector.shape_cast %5 : vector<1x128x128xbf16> to vector<128x128xbf16>
    %cst = arith.constant dense<0.000000e+00> : vector<64x128xf32>
    %7 = tpu.matmul %0, %6, %cst {dimension_numbers = #tpu.dot_dimension_numbers<[1], [0], [0], [1], [0, 0, 1, 1], [], []>} : vector<64x128xbf16>, vector<128x128xbf16>, vector<64x128xf32> -> vector<64x128xf32>
    %8 = arith.truncf %7 : vector<64x128xf32> to vector<64x128xbf16>
    %c1 = arith.constant 1 : index
    %c0_7 = arith.constant 0 : index
    %c0_8 = arith.constant 0 : index
    %9 = vector.load %arg6[%c1, %c0_7, %c0_8] : memref<5x64x128xbf16, #tpu.memory_space<vmem>>, vector<1x64x128xbf16>
    %10 = vector.shape_cast %9 : vector<1x64x128xbf16> to vector<64x128xbf16>
    %11 = vector.shape_cast %8 : vector<64x128xbf16> to vector<1x64x128xbf16>
    tpu.vector_store %arg6[%c1, %c0_7, %c0_8], %11 {strides = array<i32>} : memref<5x64x128xbf16, #tpu.memory_space<vmem>>, vector<1x64x128xbf16>,
    %cst_9 = arith.constant dense<0.000000e+00> : vector<64x128xf32>
    %12 = tpu.matmul %8, %6, %cst_9 {dimension_numbers = #tpu.dot_dimension_numbers<[1], [0], [0], [1], [0, 0, 1, 1], [], []>} : vector<64x128xbf16>, vector<128x128xbf16>, vector<64x128xf32> -> vector<64x128xf32>
    %cst_10 = arith.constant 2.000000e+00 : f32
    %13 = vector.broadcast %cst_10 : f32 to vector<64x128xf32>
    %14 = arith.mulf %13, %12 : vector<64x128xf32>
    %15 = arith.subf %14, %4 : vector<64x128xf32>
    %16 = arith.truncf %15 : vector<64x128xf32> to vector<64x128xbf16>
    %c2 = arith.constant 2 : index
    %c0_11 = arith.constant 0 : index
    %c0_12 = arith.constant 0 : index
    %17 = vector.load %arg6[%c2, %c0_11, %c0_12] : memref<5x64x128xbf16, #tpu.memory_space<vmem>>, vector<1x64x128xbf16>
    %18 = vector.shape_cast %17 : vector<1x64x128xbf16> to vector<64x128xbf16>
    %19 = vector.shape_cast %16 : vector<64x128xbf16> to vector<1x64x128xbf16>
    tpu.vector_store %arg6[%c2, %c0_11, %c0_12], %19 {strides = array<i32>} : memref<5x64x128xbf16, #tpu.memory_space<vmem>>, vector<1x64x128xbf16>,
    %c1_13 = arith.constant 1 : index
    %c0_14 = arith.constant 0 : index
    %c0_15 = arith.constant 0 : index
    %20 = vector.load %arg2[%c1_13, %c0_14, %c0_15] : memref<2x128x128xbf16, #tpu.memory_space<vmem>>, vector<1x128x128xbf16>
    %21 = vector.shape_cast %20 : vector<1x128x128xbf16> to vector<128x128xbf16>
    %cst_16 = arith.constant dense<0.000000e+00> : vector<64x128xf32>
    %22 = tpu.matmul %0, %21, %cst_16 {dimension_numbers = #tpu.dot_dimension_numbers<[1], [0], [0], [1], [0, 0, 1, 1], [], []>} : vector<64x128xbf16>, vector<128x128xbf16>, vector<64x128xf32> -> vector<64x128xf32>
    %23 = arith.truncf %22 : vector<64x128xf32> to vector<64x128xbf16>
    %c3 = arith.constant 3 : index
    %c0_17 = arith.constant 0 : index
    %c0_18 = arith.constant 0 : index
    %24 = vector.load %arg6[%c3, %c0_17, %c0_18] : memref<5x64x128xbf16, #tpu.memory_space<vmem>>, vector<1x64x128xbf16>
    %25 = vector.shape_cast %24 : vector<1x64x128xbf16> to vector<64x128xbf16>
    %26 = vector.shape_cast %23 : vector<64x128xbf16> to vector<1x64x128xbf16>
    tpu.vector_store %arg6[%c3, %c0_17, %c0_18], %26 {strides = array<i32>} : memref<5x64x128xbf16, #tpu.memory_space<vmem>>, vector<1x64x128xbf16>,
    %cst_19 = arith.constant dense<0.000000e+00> : vector<64x128xf32>
    %27 = tpu.matmul %23, %21, %cst_19 {dimension_numbers = #tpu.dot_dimension_numbers<[1], [0], [0], [1], [0, 0, 1, 1], [], []>} : vector<64x128xbf16>, vector<128x128xbf16>, vector<64x128xf32> -> vector<64x128xf32>
    %cst_20 = arith.constant 2.000000e+00 : f32
    %28 = vector.broadcast %cst_20 : f32 to vector<64x128xf32>
    %29 = arith.mulf %28, %27 : vector<64x128xf32>
    %30 = arith.subf %29, %4 : vector<64x128xf32>
    %31 = arith.truncf %30 : vector<64x128xf32> to vector<64x128xbf16>
    %c4 = arith.constant 4 : index
    %c0_21 = arith.constant 0 : index
    %c0_22 = arith.constant 0 : index
    %32 = vector.load %arg6[%c4, %c0_21, %c0_22] : memref<5x64x128xbf16, #tpu.memory_space<vmem>>, vector<1x64x128xbf16>
    %33 = vector.shape_cast %32 : vector<1x64x128xbf16> to vector<64x128xbf16>
    %34 = vector.shape_cast %31 : vector<64x128xbf16> to vector<1x64x128xbf16>
    tpu.vector_store %arg6[%c4, %c0_21, %c0_22], %34 {strides = array<i32>} : memref<5x64x128xbf16, #tpu.memory_space<vmem>>, vector<1x64x128xbf16>,
    %c0_23 = arith.constant 0 : index
    %c0_24 = arith.constant 0 : index
    %35 = vector.load %arg3[%c0_23, %c0_24] : memref<8x40xbf16, #tpu.memory_space<vmem>>, vector<8x40xbf16>
    %c0_25 = arith.constant 0 : index
    %c0_26 = arith.constant 0 : index
    %36 = vector.load %arg4[%c0_25, %c0_26] : memref<8x1xf32, #tpu.memory_space<vmem>>, vector<8x1xf32>
    %c0_27 = arith.constant 0 : index
    %c0_28 = arith.constant 0 : index
    %c0_29 = arith.constant 0 : index
    %37 = vector.load %arg6[%c0_27, %c0_28, %c0_29] : memref<5x64x128xbf16, #tpu.memory_space<vmem>>, vector<5x8x128xbf16>
    %38 = vector.shape_cast %37 : vector<5x8x128xbf16> to vector<40x128xbf16>
    %cst_30 = arith.constant dense<0.000000e+00> : vector<8x128xf32>
    %39 = tpu.matmul %35, %38, %cst_30 {dimension_numbers = #tpu.dot_dimension_numbers<[1], [0], [0], [1], [0, 0, 1, 1], [], []>} : vector<8x40xbf16>, vector<40x128xbf16>, vector<8x128xf32> -> vector<8x128xf32>
    %40 = vector.broadcast %36 : vector<8x1xf32> to vector<8x128xf32>
    %41 = arith.addf %39, %40 : vector<8x128xf32>
    %c0_31 = arith.constant 0 : index
    %c0_32 = arith.constant 0 : index
    %c0_33 = arith.constant 0 : index
    %42 = vector.load %arg5[%c0_31, %c0_32, %c0_33] : memref<8x8x128xf32, #tpu.memory_space<vmem>>, vector<1x8x128xf32>
    %43 = vector.shape_cast %42 : vector<1x8x128xf32> to vector<8x128xf32>
    %44 = vector.shape_cast %41 : vector<8x128xf32> to vector<1x8x128xf32>
    tpu.vector_store %arg5[%c0_31, %c0_32, %c0_33], %44 {strides = array<i32>} : memref<8x8x128xf32, #tpu.memory_space<vmem>>, vector<1x8x128xf32>,
    %c0_34 = arith.constant 0 : index
    %c8 = arith.constant 8 : index
    %c0_35 = arith.constant 0 : index
    %45 = vector.load %arg6[%c0_34, %c8, %c0_35] : memref<5x64x128xbf16, #tpu.memory_space<vmem>>, vector<5x8x128xbf16>
    %46 = vector.shape_cast %45 : vector<5x8x128xbf16> to vector<40x128xbf16>
    %cst_36 = arith.constant dense<0.000000e+00> : vector<8x128xf32>
    %47 = tpu.matmul %35, %46, %cst_36 {dimension_numbers = #tpu.dot_dimension_numbers<[1], [0], [0], [1], [0, 0, 1, 1], [], []>} : vector<8x40xbf16>, vector<40x128xbf16>, vector<8x128xf32> -> vector<8x128xf32>
    %48 = vector.broadcast %36 : vector<8x1xf32> to vector<8x128xf32>
    %49 = arith.addf %47, %48 : vector<8x128xf32>
    %c1_37 = arith.constant 1 : index
    %c0_38 = arith.constant 0 : index
    %c0_39 = arith.constant 0 : index
    %50 = vector.load %arg5[%c1_37, %c0_38, %c0_39] : memref<8x8x128xf32, #tpu.memory_space<vmem>>, vector<1x8x128xf32>
    %51 = vector.shape_cast %50 : vector<1x8x128xf32> to vector<8x128xf32>
    %52 = vector.shape_cast %49 : vector<8x128xf32> to vector<1x8x128xf32>
    tpu.vector_store %arg5[%c1_37, %c0_38, %c0_39], %52 {strides = array<i32>} : memref<8x8x128xf32, #tpu.memory_space<vmem>>, vector<1x8x128xf32>,
    %c0_40 = arith.constant 0 : index
    %c16 = arith.constant 16 : index
    %c0_41 = arith.constant 0 : index
    %53 = vector.load %arg6[%c0_40, %c16, %c0_41] : memref<5x64x128xbf16, #tpu.memory_space<vmem>>, vector<5x8x128xbf16>
    %54 = vector.shape_cast %53 : vector<5x8x128xbf16> to vector<40x128xbf16>
    %cst_42 = arith.constant dense<0.000000e+00> : vector<8x128xf32>
    %55 = tpu.matmul %35, %54, %cst_42 {dimension_numbers = #tpu.dot_dimension_numbers<[1], [0], [0], [1], [0, 0, 1, 1], [], []>} : vector<8x40xbf16>, vector<40x128xbf16>, vector<8x128xf32> -> vector<8x128xf32>
    %56 = vector.broadcast %36 : vector<8x1xf32> to vector<8x128xf32>
    %57 = arith.addf %55, %56 : vector<8x128xf32>
    %c2_43 = arith.constant 2 : index
    %c0_44 = arith.constant 0 : index
    %c0_45 = arith.constant 0 : index
    %58 = vector.load %arg5[%c2_43, %c0_44, %c0_45] : memref<8x8x128xf32, #tpu.memory_space<vmem>>, vector<1x8x128xf32>
    %59 = vector.shape_cast %58 : vector<1x8x128xf32> to vector<8x128xf32>
    %60 = vector.shape_cast %57 : vector<8x128xf32> to vector<1x8x128xf32>
    tpu.vector_store %arg5[%c2_43, %c0_44, %c0_45], %60 {strides = array<i32>} : memref<8x8x128xf32, #tpu.memory_space<vmem>>, vector<1x8x128xf32>,
    %c0_46 = arith.constant 0 : index
    %c24 = arith.constant 24 : index
    %c0_47 = arith.constant 0 : index
    %61 = vector.load %arg6[%c0_46, %c24, %c0_47] : memref<5x64x128xbf16, #tpu.memory_space<vmem>>, vector<5x8x128xbf16>
    %62 = vector.shape_cast %61 : vector<5x8x128xbf16> to vector<40x128xbf16>
    %cst_48 = arith.constant dense<0.000000e+00> : vector<8x128xf32>
    %63 = tpu.matmul %35, %62, %cst_48 {dimension_numbers = #tpu.dot_dimension_numbers<[1], [0], [0], [1], [0, 0, 1, 1], [], []>} : vector<8x40xbf16>, vector<40x128xbf16>, vector<8x128xf32> -> vector<8x128xf32>
    %64 = vector.broadcast %36 : vector<8x1xf32> to vector<8x128xf32>
    %65 = arith.addf %63, %64 : vector<8x128xf32>
    %c3_49 = arith.constant 3 : index
    %c0_50 = arith.constant 0 : index
    %c0_51 = arith.constant 0 : index
    %66 = vector.load %arg5[%c3_49, %c0_50, %c0_51] : memref<8x8x128xf32, #tpu.memory_space<vmem>>, vector<1x8x128xf32>
    %67 = vector.shape_cast %66 : vector<1x8x128xf32> to vector<8x128xf32>
    %68 = vector.shape_cast %65 : vector<8x128xf32> to vector<1x8x128xf32>
    tpu.vector_store %arg5[%c3_49, %c0_50, %c0_51], %68 {strides = array<i32>} : memref<8x8x128xf32, #tpu.memory_space<vmem>>, vector<1x8x128xf32>,
    %c0_52 = arith.constant 0 : index
    %c32 = arith.constant 32 : index
    %c0_53 = arith.constant 0 : index
    %69 = vector.load %arg6[%c0_52, %c32, %c0_53] : memref<5x64x128xbf16, #tpu.memory_space<vmem>>, vector<5x8x128xbf16>
    %70 = vector.shape_cast %69 : vector<5x8x128xbf16> to vector<40x128xbf16>
    %cst_54 = arith.constant dense<0.000000e+00> : vector<8x128xf32>
    %71 = tpu.matmul %35, %70, %cst_54 {dimension_numbers = #tpu.dot_dimension_numbers<[1], [0], [0], [1], [0, 0, 1, 1], [], []>} : vector<8x40xbf16>, vector<40x128xbf16>, vector<8x128xf32> -> vector<8x128xf32>
    %72 = vector.broadcast %36 : vector<8x1xf32> to vector<8x128xf32>
    %73 = arith.addf %71, %72 : vector<8x128xf32>
    %c4_55 = arith.constant 4 : index
    %c0_56 = arith.constant 0 : index
    %c0_57 = arith.constant 0 : index
    %74 = vector.load %arg5[%c4_55, %c0_56, %c0_57] : memref<8x8x128xf32, #tpu.memory_space<vmem>>, vector<1x8x128xf32>
    %75 = vector.shape_cast %74 : vector<1x8x128xf32> to vector<8x128xf32>
    %76 = vector.shape_cast %73 : vector<8x128xf32> to vector<1x8x128xf32>
    tpu.vector_store %arg5[%c4_55, %c0_56, %c0_57], %76 {strides = array<i32>} : memref<8x8x128xf32, #tpu.memory_space<vmem>>, vector<1x8x128xf32>,
    %c0_58 = arith.constant 0 : index
    %c40 = arith.constant 40 : index
    %c0_59 = arith.constant 0 : index
    %77 = vector.load %arg6[%c0_58, %c40, %c0_59] : memref<5x64x128xbf16, #tpu.memory_space<vmem>>, vector<5x8x128xbf16>
    %78 = vector.shape_cast %77 : vector<5x8x128xbf16> to vector<40x128xbf16>
    %cst_60 = arith.constant dense<0.000000e+00> : vector<8x128xf32>
    %79 = tpu.matmul %35, %78, %cst_60 {dimension_numbers = #tpu.dot_dimension_numbers<[1], [0], [0], [1], [0, 0, 1, 1], [], []>} : vector<8x40xbf16>, vector<40x128xbf16>, vector<8x128xf32> -> vector<8x128xf32>
    %80 = vector.broadcast %36 : vector<8x1xf32> to vector<8x128xf32>
    %81 = arith.addf %79, %80 : vector<8x128xf32>
    %c5 = arith.constant 5 : index
    %c0_61 = arith.constant 0 : index
    %c0_62 = arith.constant 0 : index
    %82 = vector.load %arg5[%c5, %c0_61, %c0_62] : memref<8x8x128xf32, #tpu.memory_space<vmem>>, vector<1x8x128xf32>
    %83 = vector.shape_cast %82 : vector<1x8x128xf32> to vector<8x128xf32>
    %84 = vector.shape_cast %81 : vector<8x128xf32> to vector<1x8x128xf32>
    tpu.vector_store %arg5[%c5, %c0_61, %c0_62], %84 {strides = array<i32>} : memref<8x8x128xf32, #tpu.memory_space<vmem>>, vector<1x8x128xf32>,
    %c0_63 = arith.constant 0 : index
    %c48 = arith.constant 48 : index
    %c0_64 = arith.constant 0 : index
    %85 = vector.load %arg6[%c0_63, %c48, %c0_64] : memref<5x64x128xbf16, #tpu.memory_space<vmem>>, vector<5x8x128xbf16>
    %86 = vector.shape_cast %85 : vector<5x8x128xbf16> to vector<40x128xbf16>
    %cst_65 = arith.constant dense<0.000000e+00> : vector<8x128xf32>
    %87 = tpu.matmul %35, %86, %cst_65 {dimension_numbers = #tpu.dot_dimension_numbers<[1], [0], [0], [1], [0, 0, 1, 1], [], []>} : vector<8x40xbf16>, vector<40x128xbf16>, vector<8x128xf32> -> vector<8x128xf32>
    %88 = vector.broadcast %36 : vector<8x1xf32> to vector<8x128xf32>
    %89 = arith.addf %87, %88 : vector<8x128xf32>
    %c6 = arith.constant 6 : index
    %c0_66 = arith.constant 0 : index
    %c0_67 = arith.constant 0 : index
    %90 = vector.load %arg5[%c6, %c0_66, %c0_67] : memref<8x8x128xf32, #tpu.memory_space<vmem>>, vector<1x8x128xf32>
    %91 = vector.shape_cast %90 : vector<1x8x128xf32> to vector<8x128xf32>
    %92 = vector.shape_cast %89 : vector<8x128xf32> to vector<1x8x128xf32>
    tpu.vector_store %arg5[%c6, %c0_66, %c0_67], %92 {strides = array<i32>} : memref<8x8x128xf32, #tpu.memory_space<vmem>>, vector<1x8x128xf32>,
    %c0_68 = arith.constant 0 : index
    %c56 = arith.constant 56 : index
    %c0_69 = arith.constant 0 : index
    %93 = vector.load %arg6[%c0_68, %c56, %c0_69] : memref<5x64x128xbf16, #tpu.memory_space<vmem>>, vector<5x8x128xbf16>
    %94 = vector.shape_cast %93 : vector<5x8x128xbf16> to vector<40x128xbf16>
    %cst_70 = arith.constant dense<0.000000e+00> : vector<8x128xf32>
    %95 = tpu.matmul %35, %94, %cst_70 {dimension_numbers = #tpu.dot_dimension_numbers<[1], [0], [0], [1], [0, 0, 1, 1], [], []>} : vector<8x40xbf16>, vector<40x128xbf16>, vector<8x128xf32> -> vector<8x128xf32>
    %96 = vector.broadcast %36 : vector<8x1xf32> to vector<8x128xf32>
    %97 = arith.addf %95, %96 : vector<8x128xf32>
    %c7 = arith.constant 7 : index
    %c0_71 = arith.constant 0 : index
    %c0_72 = arith.constant 0 : index
    %98 = vector.load %arg5[%c7, %c0_71, %c0_72] : memref<8x8x128xf32, #tpu.memory_space<vmem>>, vector<1x8x128xf32>
    %99 = vector.shape_cast %98 : vector<1x8x128xf32> to vector<8x128xf32>
    %100 = vector.shape_cast %97 : vector<8x128xf32> to vector<1x8x128xf32>
    tpu.vector_store %arg5[%c7, %c0_71, %c0_72], %100 {strides = array<i32>} : memref<8x8x128xf32, #tpu.memory_space<vmem>>, vector<1x8x128xf32>,
    return
  }
  func.func @transform_0(%arg0: i32) -> (i32, i32) {
    %c0_i32 = arith.constant 0 : i32
    %c0_i32_0 = arith.constant 0 : i32
    return %arg0, %c0_i32 : i32, i32
  }
  func.func @transform_1(%arg0: i32) -> (i32, i32, i32) {
    %c0_i32 = arith.constant 0 : i32
    %c0_i32_0 = arith.constant 0 : i32
    %c0_i32_1 = arith.constant 0 : i32
    %c0_i32_2 = arith.constant 0 : i32
    return %c0_i32, %c0_i32_0, %c0_i32_1 : i32, i32, i32
  }
  func.func @transform_2(%arg0: i32) -> (i32, i32) {
    %c0_i32 = arith.constant 0 : i32
    %c0_i32_0 = arith.constant 0 : i32
    %c0_i32_1 = arith.constant 0 : i32
    return %c0_i32, %c0_i32_0 : i32, i32
  }
  func.func @transform_3(%arg0: i32) -> (i32, i32) {
    %c0_i32 = arith.constant 0 : i32
    %c0_i32_0 = arith.constant 0 : i32
    %c0_i32_1 = arith.constant 0 : i32
    return %c0_i32, %c0_i32_0 : i32, i32
  }
  func.func @transform_4(%arg0: i32) -> (i32, i32, i32) {
    %c0_i32 = arith.constant 0 : i32
    %c0_i32_0 = arith.constant 0 : i32
    %c0_i32_1 = arith.constant 0 : i32
    return %arg0, %c0_i32, %c0_i32_0 : i32, i32, i32
  }
}

module attributes {stable_mosaic.version = 11 : i64} {
  func.func @_gconv_kernel(%arg0: i32, %arg1: memref<64x128xbf16, #tpu.memory_space<vmem>>, %arg2: memref<2x128x128xbf16, #tpu.memory_space<vmem>>, %arg3: memref<8x40xbf16, #tpu.memory_space<vmem>>, %arg4: memref<8x1xf32, #tpu.memory_space<vmem>>, %arg5: memref<8x8x128xf32, #tpu.memory_space<vmem>>, %arg6: memref<5x64x128xbf16, #tpu.memory_space<vmem>>) attributes {dimension_semantics = [#tpu.dimension_semantics<parallel>], iteration_bounds = array<i64: 2>, scalar_prefetch = 0 : i64, scratch_operands = 1 : i64, tpu.core_type = #tpu.core_type<tc>, window_params = [{transform_indices = @transform_0, window_bounds = array<i64: 64, 128>}, {pipeline_mode = #tpu.pipeline_mode<synchronous>, transform_indices = @transform_1, window_bounds = array<i64: 2, 128, 128>}, {pipeline_mode = #tpu.pipeline_mode<synchronous>, transform_indices = @transform_2, window_bounds = array<i64: 8, 40>}, {pipeline_mode = #tpu.pipeline_mode<synchronous>, transform_indices = @transform_3, window_bounds = array<i64: 8, 1>}, {transform_indices = @transform_4, window_bounds = array<i64: 8, 8, 128>}]} {
    %c0 = arith.constant 0 : index
    %c0_0 = arith.constant 0 : index
    %0 = vector.load %arg1[%c0, %c0_0] : memref<64x128xbf16, #tpu.memory_space<vmem>>, vector<64x128xbf16>
    %c0_1 = arith.constant 0 : index
    %c0_2 = arith.constant 0 : index
    %c0_3 = arith.constant 0 : index
    %1 = vector.load %arg6[%c0_1, %c0_2, %c0_3] : memref<5x64x128xbf16, #tpu.memory_space<vmem>>, vector<1x64x128xbf16>
    %2 = vector.shape_cast %1 : vector<1x64x128xbf16> to vector<64x128xbf16>
    %3 = vector.shape_cast %0 : vector<64x128xbf16> to vector<1x64x128xbf16>
    tpu.vector_store %arg6[%c0_1, %c0_2, %c0_3], %3 {strides = array<i32>} : memref<5x64x128xbf16, #tpu.memory_space<vmem>>, vector<1x64x128xbf16>,
    %4 = arith.extf %0 : vector<64x128xbf16> to vector<64x128xf32>
    %c0_4 = arith.constant 0 : index
    %c0_5 = arith.constant 0 : index
    %c0_6 = arith.constant 0 : index
    %5 = vector.load %arg2[%c0_4, %c0_5, %c0_6] : memref<2x128x128xbf16, #tpu.memory_space<vmem>>, vector<1x128x128xbf16>
    %6 = vector.shape_cast %5 : vector<1x128x128xbf16> to vector<128x128xbf16>
    %cst = arith.constant dense<0.000000e+00> : vector<64x128xf32>
    %7 = tpu.matmul %0, %6, %cst {dimension_numbers = #tpu.dot_dimension_numbers<[1], [0], [0], [1], [0, 0, 1, 1], [], []>} : vector<64x128xbf16>, vector<128x128xbf16>, vector<64x128xf32> -> vector<64x128xf32>
    %8 = arith.truncf %7 : vector<64x128xf32> to vector<64x128xbf16>
    %c1 = arith.constant 1 : index
    %c0_7 = arith.constant 0 : index
    %c0_8 = arith.constant 0 : index
    %9 = vector.load %arg6[%c1, %c0_7, %c0_8] : memref<5x64x128xbf16, #tpu.memory_space<vmem>>, vector<1x64x128xbf16>
    %10 = vector.shape_cast %9 : vector<1x64x128xbf16> to vector<64x128xbf16>
    %11 = vector.shape_cast %8 : vector<64x128xbf16> to vector<1x64x128xbf16>
    tpu.vector_store %arg6[%c1, %c0_7, %c0_8], %11 {strides = array<i32>} : memref<5x64x128xbf16, #tpu.memory_space<vmem>>, vector<1x64x128xbf16>,
    %cst_9 = arith.constant dense<0.000000e+00> : vector<64x128xf32>
    %12 = tpu.matmul %8, %6, %cst_9 {dimension_numbers = #tpu.dot_dimension_numbers<[1], [0], [0], [1], [0, 0, 1, 1], [], []>} : vector<64x128xbf16>, vector<128x128xbf16>, vector<64x128xf32> -> vector<64x128xf32>
    %cst_10 = arith.constant 2.000000e+00 : f32
    %13 = vector.broadcast %cst_10 : f32 to vector<64x128xf32>
    %14 = arith.mulf %13, %12 : vector<64x128xf32>
    %15 = arith.subf %14, %4 : vector<64x128xf32>
    %16 = arith.truncf %15 : vector<64x128xf32> to vector<64x128xbf16>
    %c2 = arith.constant 2 : index
    %c0_11 = arith.constant 0 : index
    %c0_12 = arith.constant 0 : index
    %17 = vector.load %arg6[%c2, %c0_11, %c0_12] : memref<5x64x128xbf16, #tpu.memory_space<vmem>>, vector<1x64x128xbf16>
    %18 = vector.shape_cast %17 : vector<1x64x128xbf16> to vector<64x128xbf16>
    %19 = vector.shape_cast %16 : vector<64x128xbf16> to vector<1x64x128xbf16>
    tpu.vector_store %arg6[%c2, %c0_11, %c0_12], %19 {strides = array<i32>} : memref<5x64x128xbf16, #tpu.memory_space<vmem>>, vector<1x64x128xbf16>,
    %c1_13 = arith.constant 1 : index
    %c0_14 = arith.constant 0 : index
    %c0_15 = arith.constant 0 : index
    %20 = vector.load %arg2[%c1_13, %c0_14, %c0_15] : memref<2x128x128xbf16, #tpu.memory_space<vmem>>, vector<1x128x128xbf16>
    %21 = vector.shape_cast %20 : vector<1x128x128xbf16> to vector<128x128xbf16>
    %cst_16 = arith.constant dense<0.000000e+00> : vector<64x128xf32>
    %22 = tpu.matmul %0, %21, %cst_16 {dimension_numbers = #tpu.dot_dimension_numbers<[1], [0], [0], [1], [0, 0, 1, 1], [], []>} : vector<64x128xbf16>, vector<128x128xbf16>, vector<64x128xf32> -> vector<64x128xf32>
    %23 = arith.truncf %22 : vector<64x128xf32> to vector<64x128xbf16>
    %c3 = arith.constant 3 : index
    %c0_17 = arith.constant 0 : index
    %c0_18 = arith.constant 0 : index
    %24 = vector.load %arg6[%c3, %c0_17, %c0_18] : memref<5x64x128xbf16, #tpu.memory_space<vmem>>, vector<1x64x128xbf16>
    %25 = vector.shape_cast %24 : vector<1x64x128xbf16> to vector<64x128xbf16>
    %26 = vector.shape_cast %23 : vector<64x128xbf16> to vector<1x64x128xbf16>
    tpu.vector_store %arg6[%c3, %c0_17, %c0_18], %26 {strides = array<i32>} : memref<5x64x128xbf16, #tpu.memory_space<vmem>>, vector<1x64x128xbf16>,
    %cst_19 = arith.constant dense<0.000000e+00> : vector<64x128xf32>
    %27 = tpu.matmul %23, %21, %cst_19 {dimension_numbers = #tpu.dot_dimension_numbers<[1], [0], [0], [1], [0, 0, 1, 1], [], []>} : vector<64x128xbf16>, vector<128x128xbf16>, vector<64x128xf32> -> vector<64x128xf32>
    %cst_20 = arith.constant 2.000000e+00 : f32
    %28 = vector.broadcast %cst_20 : f32 to vector<64x128xf32>
    %29 = arith.mulf %28, %27 : vector<64x128xf32>
    %30 = arith.subf %29, %4 : vector<64x128xf32>
    %31 = arith.truncf %30 : vector<64x128xf32> to vector<64x128xbf16>
    %c4 = arith.constant 4 : index
    %c0_21 = arith.constant 0 : index
    %c0_22 = arith.constant 0 : index
    %32 = vector.load %arg6[%c4, %c0_21, %c0_22] : memref<5x64x128xbf16, #tpu.memory_space<vmem>>, vector<1x64x128xbf16>
    %33 = vector.shape_cast %32 : vector<1x64x128xbf16> to vector<64x128xbf16>
    %34 = vector.shape_cast %31 : vector<64x128xbf16> to vector<1x64x128xbf16>
    tpu.vector_store %arg6[%c4, %c0_21, %c0_22], %34 {strides = array<i32>} : memref<5x64x128xbf16, #tpu.memory_space<vmem>>, vector<1x64x128xbf16>,
    %c0_23 = arith.constant 0 : index
    %c0_24 = arith.constant 0 : index
    %35 = vector.load %arg3[%c0_23, %c0_24] : memref<8x40xbf16, #tpu.memory_space<vmem>>, vector<8x40xbf16>
    %c0_25 = arith.constant 0 : index
    %c0_26 = arith.constant 0 : index
    %36 = vector.load %arg4[%c0_25, %c0_26] : memref<8x1xf32, #tpu.memory_space<vmem>>, vector<8x1xf32>
    %c0_27 = arith.constant 0 : index
    %c0_28 = arith.constant 0 : index
    %c0_29 = arith.constant 0 : index
    %37 = vector.load %arg6[%c0_27, %c0_28, %c0_29] : memref<5x64x128xbf16, #tpu.memory_space<vmem>>, vector<5x8x128xbf16>
    %38 = vector.shape_cast %37 : vector<5x8x128xbf16> to vector<40x128xbf16>
    %cst_30 = arith.constant dense<0.000000e+00> : vector<8x128xf32>
    %39 = tpu.matmul %35, %38, %cst_30 {dimension_numbers = #tpu.dot_dimension_numbers<[1], [0], [0], [1], [0, 0, 1, 1], [], []>} : vector<8x40xbf16>, vector<40x128xbf16>, vector<8x128xf32> -> vector<8x128xf32>
    %40 = vector.broadcast %36 : vector<8x1xf32> to vector<8x128xf32>
    %41 = arith.addf %39, %40 : vector<8x128xf32>
    %c0_31 = arith.constant 0 : index
    %c0_32 = arith.constant 0 : index
    %c0_33 = arith.constant 0 : index
    %42 = vector.load %arg5[%c0_31, %c0_32, %c0_33] : memref<8x8x128xf32, #tpu.memory_space<vmem>>, vector<1x8x128xf32>
    %43 = vector.shape_cast %42 : vector<1x8x128xf32> to vector<8x128xf32>
    %44 = vector.shape_cast %41 : vector<8x128xf32> to vector<1x8x128xf32>
    tpu.vector_store %arg5[%c0_31, %c0_32, %c0_33], %44 {strides = array<i32>} : memref<8x8x128xf32, #tpu.memory_space<vmem>>, vector<1x8x128xf32>,
    %c0_34 = arith.constant 0 : index
    %c8 = arith.constant 8 : index
    %c0_35 = arith.constant 0 : index
    %45 = vector.load %arg6[%c0_34, %c8, %c0_35] : memref<5x64x128xbf16, #tpu.memory_space<vmem>>, vector<5x8x128xbf16>
    %46 = vector.shape_cast %45 : vector<5x8x128xbf16> to vector<40x128xbf16>
    %cst_36 = arith.constant dense<0.000000e+00> : vector<8x128xf32>
    %47 = tpu.matmul %35, %46, %cst_36 {dimension_numbers = #tpu.dot_dimension_numbers<[1], [0], [0], [1], [0, 0, 1, 1], [], []>} : vector<8x40xbf16>, vector<40x128xbf16>, vector<8x128xf32> -> vector<8x128xf32>
    %48 = vector.broadcast %36 : vector<8x1xf32> to vector<8x128xf32>
    %49 = arith.addf %47, %48 : vector<8x128xf32>
    %c1_37 = arith.constant 1 : index
    %c0_38 = arith.constant 0 : index
    %c0_39 = arith.constant 0 : index
    %50 = vector.load %arg5[%c1_37, %c0_38, %c0_39] : memref<8x8x128xf32, #tpu.memory_space<vmem>>, vector<1x8x128xf32>
    %51 = vector.shape_cast %50 : vector<1x8x128xf32> to vector<8x128xf32>
    %52 = vector.shape_cast %49 : vector<8x128xf32> to vector<1x8x128xf32>
    tpu.vector_store %arg5[%c1_37, %c0_38, %c0_39], %52 {strides = array<i32>} : memref<8x8x128xf32, #tpu.memory_space<vmem>>, vector<1x8x128xf32>,
    %c0_40 = arith.constant 0 : index
    %c16 = arith.constant 16 : index
    %c0_41 = arith.constant 0 : index
    %53 = vector.load %arg6[%c0_40, %c16, %c0_41] : memref<5x64x128xbf16, #tpu.memory_space<vmem>>, vector<5x8x128xbf16>
    %54 = vector.shape_cast %53 : vector<5x8x128xbf16> to vector<40x128xbf16>
    %cst_42 = arith.constant dense<0.000000e+00> : vector<8x128xf32>
    %55 = tpu.matmul %35, %54, %cst_42 {dimension_numbers = #tpu.dot_dimension_numbers<[1], [0], [0], [1], [0, 0, 1, 1], [], []>} : vector<8x40xbf16>, vector<40x128xbf16>, vector<8x128xf32> -> vector<8x128xf32>
    %56 = vector.broadcast %36 : vector<8x1xf32> to vector<8x128xf32>
    %57 = arith.addf %55, %56 : vector<8x128xf32>
    %c2_43 = arith.constant 2 : index
    %c0_44 = arith.constant 0 : index
    %c0_45 = arith.constant 0 : index
    %58 = vector.load %arg5[%c2_43, %c0_44, %c0_45] : memref<8x8x128xf32, #tpu.memory_space<vmem>>, vector<1x8x128xf32>
    %59 = vector.shape_cast %58 : vector<1x8x128xf32> to vector<8x128xf32>
    %60 = vector.shape_cast %57 : vector<8x128xf32> to vector<1x8x128xf32>
    tpu.vector_store %arg5[%c2_43, %c0_44, %c0_45], %60 {strides = array<i32>} : memref<8x8x128xf32, #tpu.memory_space<vmem>>, vector<1x8x128xf32>,
    %c0_46 = arith.constant 0 : index
    %c24 = arith.constant 24 : index
    %c0_47 = arith.constant 0 : index
    %61 = vector.load %arg6[%c0_46, %c24, %c0_47] : memref<5x64x128xbf16, #tpu.memory_space<vmem>>, vector<5x8x128xbf16>
    %62 = vector.shape_cast %61 : vector<5x8x128xbf16> to vector<40x128xbf16>
    %cst_48 = arith.constant dense<0.000000e+00> : vector<8x128xf32>
    %63 = tpu.matmul %35, %62, %cst_48 {dimension_numbers = #tpu.dot_dimension_numbers<[1], [0], [0], [1], [0, 0, 1, 1], [], []>} : vector<8x40xbf16>, vector<40x128xbf16>, vector<8x128xf32> -> vector<8x128xf32>
    %64 = vector.broadcast %36 : vector<8x1xf32> to vector<8x128xf32>
    %65 = arith.addf %63, %64 : vector<8x128xf32>
    %c3_49 = arith.constant 3 : index
    %c0_50 = arith.constant 0 : index
    %c0_51 = arith.constant 0 : index
    %66 = vector.load %arg5[%c3_49, %c0_50, %c0_51] : memref<8x8x128xf32, #tpu.memory_space<vmem>>, vector<1x8x128xf32>
    %67 = vector.shape_cast %66 : vector<1x8x128xf32> to vector<8x128xf32>
    %68 = vector.shape_cast %65 : vector<8x128xf32> to vector<1x8x128xf32>
    tpu.vector_store %arg5[%c3_49, %c0_50, %c0_51], %68 {strides = array<i32>} : memref<8x8x128xf32, #tpu.memory_space<vmem>>, vector<1x8x128xf32>,
    %c0_52 = arith.constant 0 : index
    %c32 = arith.constant 32 : index
    %c0_53 = arith.constant 0 : index
    %69 = vector.load %arg6[%c0_52, %c32, %c0_53] : memref<5x64x128xbf16, #tpu.memory_space<vmem>>, vector<5x8x128xbf16>
    %70 = vector.shape_cast %69 : vector<5x8x128xbf16> to vector<40x128xbf16>
    %cst_54 = arith.constant dense<0.000000e+00> : vector<8x128xf32>
    %71 = tpu.matmul %35, %70, %cst_54 {dimension_numbers = #tpu.dot_dimension_numbers<[1], [0], [0], [1], [0, 0, 1, 1], [], []>} : vector<8x40xbf16>, vector<40x128xbf16>, vector<8x128xf32> -> vector<8x128xf32>
    %72 = vector.broadcast %36 : vector<8x1xf32> to vector<8x128xf32>
    %73 = arith.addf %71, %72 : vector<8x128xf32>
    %c4_55 = arith.constant 4 : index
    %c0_56 = arith.constant 0 : index
    %c0_57 = arith.constant 0 : index
    %74 = vector.load %arg5[%c4_55, %c0_56, %c0_57] : memref<8x8x128xf32, #tpu.memory_space<vmem>>, vector<1x8x128xf32>
    %75 = vector.shape_cast %74 : vector<1x8x128xf32> to vector<8x128xf32>
    %76 = vector.shape_cast %73 : vector<8x128xf32> to vector<1x8x128xf32>
    tpu.vector_store %arg5[%c4_55, %c0_56, %c0_57], %76 {strides = array<i32>} : memref<8x8x128xf32, #tpu.memory_space<vmem>>, vector<1x8x128xf32>,
    %c0_58 = arith.constant 0 : index
    %c40 = arith.constant 40 : index
    %c0_59 = arith.constant 0 : index
    %77 = vector.load %arg6[%c0_58, %c40, %c0_59] : memref<5x64x128xbf16, #tpu.memory_space<vmem>>, vector<5x8x128xbf16>
    %78 = vector.shape_cast %77 : vector<5x8x128xbf16> to vector<40x128xbf16>
    %cst_60 = arith.constant dense<0.000000e+00> : vector<8x128xf32>
    %79 = tpu.matmul %35, %78, %cst_60 {dimension_numbers = #tpu.dot_dimension_numbers<[1], [0], [0], [1], [0, 0, 1, 1], [], []>} : vector<8x40xbf16>, vector<40x128xbf16>, vector<8x128xf32> -> vector<8x128xf32>
    %80 = vector.broadcast %36 : vector<8x1xf32> to vector<8x128xf32>
    %81 = arith.addf %79, %80 : vector<8x128xf32>
    %c5 = arith.constant 5 : index
    %c0_61 = arith.constant 0 : index
    %c0_62 = arith.constant 0 : index
    %82 = vector.load %arg5[%c5, %c0_61, %c0_62] : memref<8x8x128xf32, #tpu.memory_space<vmem>>, vector<1x8x128xf32>
    %83 = vector.shape_cast %82 : vector<1x8x128xf32> to vector<8x128xf32>
    %84 = vector.shape_cast %81 : vector<8x128xf32> to vector<1x8x128xf32>
    tpu.vector_store %arg5[%c5, %c0_61, %c0_62], %84 {strides = array<i32>} : memref<8x8x128xf32, #tpu.memory_space<vmem>>, vector<1x8x128xf32>,
    %c0_63 = arith.constant 0 : index
    %c48 = arith.constant 48 : index
    %c0_64 = arith.constant 0 : index
    %85 = vector.load %arg6[%c0_63, %c48, %c0_64] : memref<5x64x128xbf16, #tpu.memory_space<vmem>>, vector<5x8x128xbf16>
    %86 = vector.shape_cast %85 : vector<5x8x128xbf16> to vector<40x128xbf16>
    %cst_65 = arith.constant dense<0.000000e+00> : vector<8x128xf32>
    %87 = tpu.matmul %35, %86, %cst_65 {dimension_numbers = #tpu.dot_dimension_numbers<[1], [0], [0], [1], [0, 0, 1, 1], [], []>} : vector<8x40xbf16>, vector<40x128xbf16>, vector<8x128xf32> -> vector<8x128xf32>
    %88 = vector.broadcast %36 : vector<8x1xf32> to vector<8x128xf32>
    %89 = arith.addf %87, %88 : vector<8x128xf32>
    %c6 = arith.constant 6 : index
    %c0_66 = arith.constant 0 : index
    %c0_67 = arith.constant 0 : index
    %90 = vector.load %arg5[%c6, %c0_66, %c0_67] : memref<8x8x128xf32, #tpu.memory_space<vmem>>, vector<1x8x128xf32>
    %91 = vector.shape_cast %90 : vector<1x8x128xf32> to vector<8x128xf32>
    %92 = vector.shape_cast %89 : vector<8x128xf32> to vector<1x8x128xf32>
    tpu.vector_store %arg5[%c6, %c0_66, %c0_67], %92 {strides = array<i32>} : memref<8x8x128xf32, #tpu.memory_space<vmem>>, vector<1x8x128xf32>,
    %c0_68 = arith.constant 0 : index
    %c56 = arith.constant 56 : index
    %c0_69 = arith.constant 0 : index
    %93 = vector.load %arg6[%c0_68, %c56, %c0_69] : memref<5x64x128xbf16, #tpu.memory_space<vmem>>, vector<5x8x128xbf16>
    %94 = vector.shape_cast %93 : vector<5x8x128xbf16> to vector<40x128xbf16>
    %cst_70 = arith.constant dense<0.000000e+00> : vector<8x128xf32>
    %95 = tpu.matmul %35, %94, %cst_70 {dimension_numbers = #tpu.dot_dimension_numbers<[1], [0], [0], [1], [0, 0, 1, 1], [], []>} : vector<8x40xbf16>, vector<40x128xbf16>, vector<8x128xf32> -> vector<8x128xf32>
    %96 = vector.broadcast %36 : vector<8x1xf32> to vector<8x128xf32>
    %97 = arith.addf %95, %96 : vector<8x128xf32>
    %c7 = arith.constant 7 : index
    %c0_71 = arith.constant 0 : index
    %c0_72 = arith.constant 0 : index
    %98 = vector.load %arg5[%c7, %c0_71, %c0_72] : memref<8x8x128xf32, #tpu.memory_space<vmem>>, vector<1x8x128xf32>
    %99 = vector.shape_cast %98 : vector<1x8x128xf32> to vector<8x128xf32>
    %100 = vector.shape_cast %97 : vector<8x128xf32> to vector<1x8x128xf32>
    tpu.vector_store %arg5[%c7, %c0_71, %c0_72], %100 {strides = array<i32>} : memref<8x8x128xf32, #tpu.memory_space<vmem>>, vector<1x8x128xf32>,
    return
  }
  func.func @transform_0(%arg0: i32) -> (i32, i32) {
    %c0_i32 = arith.constant 0 : i32
    %c0_i32_0 = arith.constant 0 : i32
    return %arg0, %c0_i32 : i32, i32
  }
  func.func @transform_1(%arg0: i32) -> (i32, i32, i32) {
    %c0_i32 = arith.constant 0 : i32
    %c0_i32_0 = arith.constant 0 : i32
    %c0_i32_1 = arith.constant 0 : i32
    %c0_i32_2 = arith.constant 0 : i32
    return %c0_i32, %c0_i32_0, %c0_i32_1 : i32, i32, i32
  }
  func.func @transform_2(%arg0: i32) -> (i32, i32) {
    %c0_i32 = arith.constant 0 : i32
    %c0_i32_0 = arith.constant 0 : i32
    %c0_i32_1 = arith.constant 0 : i32
    return %c0_i32, %c0_i32_0 : i32, i32
  }
  func.func @transform_3(%arg0: i32) -> (i32, i32) {
    %c0_i32 = arith.constant 0 : i32
    %c0_i32_0 = arith.constant 0 : i32
    %c0_i32_1 = arith.constant 0 : i32
    return %c0_i32, %c0_i32_0 : i32, i32
  }
  func.func @transform_4(%arg0: i32) -> (i32, i32, i32) {
    %c0_i32 = arith.constant 0 : i32
    %c0_i32_0 = arith.constant 0 : i32
    %c0_i32_1 = arith.constant 0 : i32
    return %arg0, %c0_i32, %c0_i32_0 : i32, i32, i32
  }
}

</mosaic_0001>

<llo_original>
// kernel: tpu_custom_call.1
$region0: #{tpu_custom_call.1}
  #allocation0 [shape = 'u32[]', space=smem, size = 0x4, offset = 0x4, fixed_abs, tag = 'smem constant byte address 0x4 - core index']
  #allocation1 [shape = 'u32[72,128]{1,0:T(1,128)}', space=vmem, size = 0x9000, scoped, tag = 'internal scratch']
  #allocation2 [shape = 'bf16[5,64,128]{2,1,0:T(8,128)(2,1)}', space=vmem, size = 0x14000, scoped, tag = 'scratch operand']
  %s0 = inlined_call_operand.hbm [shape: bf16[128,128], index: 0, kind: input, shape index: {}]
  %s1 = inlined_call_operand.hbm [shape: bf16[2,128,128], index: 1, kind: input, shape index: {}]
  %s2 = inlined_call_operand.vmem [shape: bf16[8,40], index: 2, kind: input, shape index: {}]
  %s3 = inlined_call_operand.vmem [shape: f32[8,1], index: 3, kind: input, shape index: {}]
  %s4 = inlined_call_operand.hbm [shape: f32[16,8,128], index: 4, kind: output, shape index: {}]
  %s5 = sld [smem:[#allocation0]]
  $region57: #{tpu_custom_call.1} parent=0
    _
  %s7 = ssub.s32 1, %s5
  %s8 = scalar_select 0, %s7, %s5
  $region1: #{tpu_custom_call.1} parent=0
    #allocation3 [shape = 'u8[32768]{0}', space=vmem, size = 0x8000, scoped, tag = 'input window, operand 0']
    #allocation4 [shape = 's32[2]{0}', space=sflag, size = 0x8, scoped, tag = 'scoped memory for tpu_custom_call.1']
    #allocation5 [shape = 's32[2]{0}', space=sflag, size = 0x8, scoped, tag = 'scoped memory for tpu_custom_call.1']
    #allocation6 [shape = 'u8[65536]{0}', space=vmem, size = 0x10000, scoped, tag = 'input window, operand 1, single buffered']
    #allocation7 [shape = 's32[1]{0}', space=sflag, size = 0x4, scoped, tag = 'scoped memory for tpu_custom_call.1']
    #allocation8 [shape = 'u8[65536]{0}', space=vmem, size = 0x10000, scoped, tag = 'output window, operand 0']
    %9 = vsyncpa [#allocation4], 0
    %s10 = scalar_lea.sflag [#allocation4], 1
    %11 = vsyncpa %s10, 0
    %12 = vsyncpa [#allocation7], 0
    %13 = vsyncpa [#allocation5], 0
    %s14 = scalar_lea.sflag [#allocation5], 1
    %15 = vsyncpa %s14, 0
    loop: start=0, step=1, limit=4
    $region2: #{tpu_custom_call.1} parent=1 // loop_pre_header
      _
    $region3: #{tpu_custom_call.1} parent=1 // loop_header
      %s17 = sphi 0, %s21
      %p18 = scmp.ge.s32.totalorder %s17, 4
      %s27 = sphi 0, %s29
      %s30 = sphi 0, %s27
      %s31 = sphi 0, %s30
      %s47 = sphi 0, %s31
      %s51 = sphi 0, %s51
      %s53 = sphi 0, %s51
      %s54 = sphi 0, %s53
      %s68 = sphi 0, %s54
      %s72 = sphi 0, %s72
      %s74 = sphi 0, %s72
      %s75 = sphi 0, %s74
      %s89 = sphi 0, %s75
      %s93 = sphi 0, %s93
      %s95 = sphi 0, %s93
      %s96 = sphi 0, %s95
      %s110 = sphi 0, %s96
      %s116 = sphi 0, %s118
      %s119 = sphi 0, %s116
      %s120 = sphi 0, %s119
      %s136 = sphi 0, %s120
    $region4: #{tpu_custom_call.1} parent=1 // loop_header_branch
      %20 = sbr.rel (%p18) target = $region8
    $region5: #{tpu_custom_call.1} parent=1 // loop_body
      %s22 = ssub.s32 %s17, 1
      %s23 = ssub.s32 %s17, 2
      %s24 = sadd.s32 %s17, 1
      %s25 = ssub.s32 %s17, %s24
      %p26 = scmp.eq.s32.totalorder %s25, 0
      %s28 = sadd.s32 %s27, 1
      %s29 = scalar_select %p26, %s27, %s28
      %p32 = pneg %p26
      %p33 = scmp.eq.s32.totalorder %s17, 1
      %p34 = por %p32, %p33
      %p35 = scmp.ne.s32.totalorder %s27, %s30
      %p36 = scmp.eq.s32.totalorder %s17, 0
      %p37 = por %p35, %p36
      %p38 = scmp.ne.s32.totalorder %s27, %s30
      %p39 = scmp.eq.s32.totalorder %s22, 1
      %p40 = por %p38, %p39
      %p41 = scmp.ne.s32.totalorder %s30, %s31
      %p42 = scmp.eq.s32.totalorder %s22, 0
      %p43 = por %p41, %p42
      %p44 = scmp.ne.s32.totalorder %s30, %s31
      %p45 = scmp.eq.s32.totalorder %s23, 1
      %p46 = por %p44, %p45
      %p48 = scmp.ne.s32.totalorder %s31, %s47
      %p49 = scmp.eq.s32.totalorder %s23, 0
      %p50 = por %p48, %p49
      %s52 = sadd.s32 %s51, 1
      %p55 = scmp.eq.s32.totalorder %s17, 1
      %p56 = scmp.ne.s32.totalorder %s51, %s53
      %p57 = scmp.eq.s32.totalorder %s17, 0
      %p58 = por %p56, %p57
      %p59 = scmp.ne.s32.totalorder %s51, %s53
      %p60 = scmp.eq.s32.totalorder %s22, 1
      %p61 = por %p59, %p60
      %p62 = scmp.ne.s32.totalorder %s53, %s54
      %p63 = scmp.eq.s32.totalorder %s22, 0
      %p64 = por %p62, %p63
      %p65 = scmp.ne.s32.totalorder %s53, %s54
      %p66 = scmp.eq.s32.totalorder %s23, 1
      %p67 = por %p65, %p66
      %p69 = scmp.ne.s32.totalorder %s54, %s68
      %p70 = scmp.eq.s32.totalorder %s23, 0
      %p71 = por %p69, %p70
      %s73 = sadd.s32 %s72, 1
      %p76 = scmp.eq.s32.totalorder %s17, 1
      %p77 = scmp.ne.s32.totalorder %s72, %s74
      %p78 = scmp.eq.s32.totalorder %s17, 0
      %p79 = por %p77, %p78
      %p80 = scmp.ne.s32.totalorder %s72, %s74
      %p81 = scmp.eq.s32.totalorder %s22, 1
      %p82 = por %p80, %p81
      %p83 = scmp.ne.s32.totalorder %s74, %s75
      %p84 = scmp.eq.s32.totalorder %s22, 0
      %p85 = por %p83, %p84
      %p86 = scmp.ne.s32.totalorder %s74, %s75
      %p87 = scmp.eq.s32.totalorder %s23, 1
      %p88 = por %p86, %p87
      %p90 = scmp.ne.s32.totalorder %s75, %s89
      %p91 = scmp.eq.s32.totalorder %s23, 0
      %p92 = por %p90, %p91
      %s94 = sadd.s32 %s93, 1
      %p97 = scmp.eq.s32.totalorder %s17, 1
      %p98 = scmp.ne.s32.totalorder %s93, %s95
      %p99 = scmp.eq.s32.totalorder %s17, 0
      %p100 = por %p98, %p99
      %p101 = scmp.ne.s32.totalorder %s93, %s95
      %p102 = scmp.eq.s32.totalorder %s22, 1
      %p103 = por %p101, %p102
      %p104 = scmp.ne.s32.totalorder %s95, %s96
      %p105 = scmp.eq.s32.totalorder %s22, 0
      %p106 = por %p104, %p105
      %p107 = scmp.ne.s32.totalorder %s95, %s96
      %p108 = scmp.eq.s32.totalorder %s23, 1
      %p109 = por %p107, %p108
      %p111 = scmp.ne.s32.totalorder %s96, %s110
      %p112 = scmp.eq.s32.totalorder %s23, 0
      %p113 = por %p111, %p112
      %s114 = ssub.s32 %s17, %s24
      %p115 = scmp.eq.s32.totalorder %s114, 0
      %s117 = sadd.s32 %s116, 1
      %s118 = scalar_select %p115, %s116, %s117
      %p121 = pneg %p115
      %p122 = scmp.eq.s32.totalorder %s17, 1
      %p123 = por %p121, %p122
      %p124 = scmp.ne.s32.totalorder %s116, %s119
      %p125 = scmp.eq.s32.totalorder %s17, 0
      %p126 = por %p124, %p125
      %p127 = scmp.ne.s32.totalorder %s116, %s119
      %p128 = scmp.eq.s32.totalorder %s22, 1
      %p129 = por %p127, %p128
      %p130 = scmp.ne.s32.totalorder %s119, %s120
      %p131 = scmp.eq.s32.totalorder %s22, 0
      %p132 = por %p130, %p131
      %p133 = scmp.ne.s32.totalorder %s119, %s120
      %p134 = scmp.eq.s32.totalorder %s23, 1
      %p135 = por %p133, %p134
      %p137 = scmp.ne.s32.totalorder %s120, %s136
      %p138 = scmp.eq.s32.totalorder %s23, 0
      %p139 = por %p137, %p138
      %p140 = scmp.le.s32.totalorder 1, %s17
      %p141 = scmp.lt.s32.totalorder %s17, 3
      %p142 = pnand %p140, %p141
      %p143 = pneg %p142
      // Predicated region
      $region9: #{tpu_custom_call.1} parent=5 // pred_check
        _
      $region10: #{tpu_custom_call.1} parent=5 // pred_check_branch
        %145 = sbr.rel (%p142) target = $region12
      $region11: #{tpu_custom_call.1} parent=5 // pred_region
        %s146 = ssub.s32 %s17, 1
        // Predicated region
        $region13: #{tpu_custom_call.1} parent=11 // pred_check
          %p147 = pneg %p64
        $region14: #{tpu_custom_call.1} parent=11 // pred_check_branch
          %149 = sbr.rel (%p147) target = $region16
        $region15: #{tpu_custom_call.1} parent=11 // pred_region
          %151 = vsyncadd [#allocation7], 0
          %s152 = sshll.u32 %s1, 4
          %s153 = int_to_ptr.hbm [resolvable:$true] %s152
          %s154 = sshll.u32 [#allocation6], 4
          %s155 = int_to_ptr.vmem [resolvable:$true] %s154
          %160 = dma.hbm_to_vmem [thread:$0]  %s153, 2048, %s155, [#allocation7], 64, 64, 4
        $region16: #{tpu_custom_call.1} parent=11 // pred_fallthru
          _
        // Predicated region
        $region17: #{tpu_custom_call.1} parent=11 // pred_check
          %p161 = pneg %p85
        $region18: #{tpu_custom_call.1} parent=11 // pred_check_branch
          %163 = sbr.rel (%p161) target = $region20
        $region19: #{tpu_custom_call.1} parent=11 // pred_region
          _
        $region20: #{tpu_custom_call.1} parent=11 // pred_fallthru
          _
        // Predicated region
        $region21: #{tpu_custom_call.1} parent=11 // pred_check
          %p164 = pneg %p106
        $region22: #{tpu_custom_call.1} parent=11 // pred_check_branch
          %166 = sbr.rel (%p164) target = $region24
        $region23: #{tpu_custom_call.1} parent=11 // pred_region
          _
        $region24: #{tpu_custom_call.1} parent=11 // pred_fallthru
          _
      $region12: #{tpu_custom_call.1} parent=5 // pred_fallthru
        _
      %p167 = scmp.lt.s32.totalorder %s17, 2
      // Predicated region
      $region25: #{tpu_custom_call.1} parent=5 // pred_check
        %p168 = pneg %p167
      $region26: #{tpu_custom_call.1} parent=5 // pred_check_branch
        %170 = sbr.rel (%p168) target = $region28
      $region27: #{tpu_custom_call.1} parent=5 // pred_region
        // Predicated region
        $region29: #{tpu_custom_call.1} parent=27 // pred_check
          %p171 = pneg %p37
        $region30: #{tpu_custom_call.1} parent=27 // pred_check_branch
          %173 = sbr.rel (%p171) target = $region32
        $region31: #{tpu_custom_call.1} parent=27 // pred_region
          %s174 = sand.u32 %s27, 1
          %s175 = scalar_lea.sflag [#allocation4], %s174
          %s176 = sand.u32 %s27, 1
          %s177 = smul.addr %s176, 32
          %s178 = scalar_lea.vmem [#allocation3], %s177
          %s179 = smul.u32 8, %s17
          %181 = vsyncadd %s175, 0
          %s182 = smul.addr %s179, 4
          %s183 = scalar_lea.hbm %s0, %s182
          %s184 = sshll.u32 %s183, 4
          %s185 = int_to_ptr.hbm [resolvable:$true] %s184
          %s186 = sshll.u32 %s178, 4
          %s187 = int_to_ptr.vmem [resolvable:$true] %s186
          %192 = dma.hbm_to_vmem [thread:$0]  %s185, 512, %s187, %s175, 64, 64, 4
        $region32: #{tpu_custom_call.1} parent=27 // pred_fallthru
          _
      $region28: #{tpu_custom_call.1} parent=5 // pred_fallthru
        _
      %p193 = scmp.le.s32.totalorder 1, %s17
      %p194 = scmp.lt.s32.totalorder %s17, 3
      %p195 = pnand %p193, %p194
      %p196 = pneg %p195
      // Predicated region
      $region33: #{tpu_custom_call.1} parent=5 // pred_check
        _
      $region34: #{tpu_custom_call.1} parent=5 // pred_check_branch
        %198 = sbr.rel (%p195) target = $region36
      $region35: #{tpu_custom_call.1} parent=5 // pred_region
        %s199 = ssub.s32 %s17, 1
        %s200 = sand.u32 %s30, 1
        %s201 = scalar_lea.sflag [#allocation4], %s200
        %s202 = sand.u32 %s30, 1
        %s203 = smul.addr %s202, 32
        %s204 = scalar_lea.vmem [#allocation3], %s203
        // Predicated region
        $region37: #{tpu_custom_call.1} parent=35 // pred_check
          %p205 = pneg %p43
        $region38: #{tpu_custom_call.1} parent=35 // pred_check_branch
          %207 = sbr.rel (%p205) target = $region40
        $region39: #{tpu_custom_call.1} parent=35 // pred_region
          %209 = dma.done %s201, 512
        $region40: #{tpu_custom_call.1} parent=35 // pred_fallthru
          _
        // Predicated region
        $region41: #{tpu_custom_call.1} parent=35 // pred_check
          %p210 = pneg %p64
        $region42: #{tpu_custom_call.1} parent=35 // pred_check_branch
          %212 = sbr.rel (%p210) target = $region44
        $region43: #{tpu_custom_call.1} parent=35 // pred_region
          %214 = dma.done [#allocation7], 2048
        $region44: #{tpu_custom_call.1} parent=35 // pred_fallthru
          _
        %s215 = sand.u32 %s30, 1
        %s216 = scalar_lea.sflag [#allocation4], %s215
        %s217 = sand.u32 %s30, 1
        %s218 = smul.addr %s217, 32
        %s219 = scalar_lea.vmem [#allocation3], %s218
        %p220 = pneg %p43
        %p221 = pneg %p40
        %p222 = pneg %p64
        %p223 = pneg %p61
        %p224 = pneg %p85
        %p225 = pneg %p82
        %p226 = pneg %p106
        %p227 = pneg %p103
        %p228 = pneg %p132
        %p229 = pneg %p129
        %s230 = sand.u32 %s119, 1
        %s231 = scalar_lea.sflag [#allocation5], %s230
        %s232 = sand.u32 %s119, 1
        %s233 = smul.addr %s232, 64
        %s234 = scalar_lea.vmem [#allocation8], %s233
        %s235 = smul.u32 8, %s22
        %s236 = smul.u32 8, %s22
        %v238 = vld [vmem:[%s204] sm:$0xf]
        %v239 = vld [vmem:[%s204 + $0x4] sm:$0xf]
        %v240 = vld [vmem:[%s204 + $0x8] sm:$0xf]
        %v241 = vld [vmem:[%s204 + $0xc] sm:$0xf]
        %v242 = vld [vmem:[%s204 + $0x10] sm:$0xf]
        %v243 = vld [vmem:[%s204 + $0x14] sm:$0xf]
        %v244 = vld [vmem:[%s204 + $0x18] sm:$0xf]
        %v245 = vld [vmem:[%s204 + $0x1c] sm:$0xf]
        %246 = vst [vmem:[#allocation2] sm:$0xf] %v238
        %247 = vst [vmem:[#allocation2 + $0x4] sm:$0xf] %v239
        %248 = vst [vmem:[#allocation2 + $0x8] sm:$0xf] %v240
        %249 = vst [vmem:[#allocation2 + $0xc] sm:$0xf] %v241
        %250 = vst [vmem:[#allocation2 + $0x10] sm:$0xf] %v242
        %251 = vst [vmem:[#allocation2 + $0x14] sm:$0xf] %v243
        %252 = vst [vmem:[#allocation2 + $0x18] sm:$0xf] %v244
        %253 = vst [vmem:[#allocation2 + $0x1c] sm:$0xf] %v245
        %v254 = vunpack.c.l.bf16 %v238
        %v255 = vunpack.c.l.bf16 %v239
        %v256 = vunpack.c.l.bf16 %v240
        %v257 = vunpack.c.l.bf16 %v241
        %v258 = vunpack.c.l.bf16 %v242
        %v259 = vunpack.c.l.bf16 %v243
        %v260 = vunpack.c.l.bf16 %v244
        %v261 = vunpack.c.l.bf16 %v245
        %v262 = vld [vmem:[#allocation6] sm:$0xf]
        %v263 = vld [vmem:[#allocation6 + $0x4] sm:$0xf]
        %v264 = vld [vmem:[#allocation6 + $0x8] sm:$0xf]
        %v265 = vld [vmem:[#allocation6 + $0xc] sm:$0xf]
        %v266 = vld [vmem:[#allocation6 + $0x10] sm:$0xf]
        %v267 = vld [vmem:[#allocation6 + $0x14] sm:$0xf]
        %v268 = vld [vmem:[#allocation6 + $0x18] sm:$0xf]
        %v269 = vld [vmem:[#allocation6 + $0x1c] sm:$0xf]
        %v270 = vld [vmem:[#allocation6 + $0x20] sm:$0xf]
        %v271 = vld [vmem:[#allocation6 + $0x24] sm:$0xf]
        %v272 = vld [vmem:[#allocation6 + $0x28] sm:$0xf]
        %v273 = vld [vmem:[#allocation6 + $0x2c] sm:$0xf]
        %v274 = vld [vmem:[#allocation6 + $0x30] sm:$0xf]
        %v275 = vld [vmem:[#allocation6 + $0x34] sm:$0xf]
        %v276 = vld [vmem:[#allocation6 + $0x38] sm:$0xf]
        %v277 = vld [vmem:[#allocation6 + $0x3c] sm:$0xf]
        %v286 = vunpack.c.l.b16 %v238
        %v287 = vunpack.c.l.b16 %v239
        %v288 = vunpack.c.l.b16 %v240
        %v289 = vunpack.c.l.b16 %v241
        %v290 = vunpack.c.l.b16 %v242
        %v291 = vunpack.c.l.b16 %v243
        %v292 = vunpack.c.l.b16 %v244
        %v293 = vunpack.c.l.b16 %v245
        %v294 = vpack.c.b16 %v287, %v286
        %v295 = vpack.c.b16 %v289, %v288
        %v296 = vpack.c.b16 %v291, %v290
        %v297 = vpack.c.b16 %v293, %v292
        %v318 = vunpack.c.l.b16 %v262
        %v319 = vunpack.c.l.b16 %v263
        %v320 = vunpack.c.l.b16 %v264
        %v321 = vunpack.c.l.b16 %v265
        %v322 = vunpack.c.l.b16 %v266
        %v323 = vunpack.c.l.b16 %v267
        %v324 = vunpack.c.l.b16 %v268
        %v325 = vunpack.c.l.b16 %v269
        %v326 = vunpack.c.l.b16 %v270
        %v327 = vunpack.c.l.b16 %v271
        %v328 = vunpack.c.l.b16 %v272
        %v329 = vunpack.c.l.b16 %v273
        %v330 = vunpack.c.l.b16 %v274
        %v331 = vunpack.c.l.b16 %v275
        %v332 = vunpack.c.l.b16 %v276
        %v333 = vunpack.c.l.b16 %v277
        %v334 = vpack.c.b16 %v319, %v318
        %v335 = vpack.c.b16 %v321, %v320
        %v336 = vpack.c.b16 %v323, %v322
        %v337 = vpack.c.b16 %v325, %v324
        %v338 = vpack.c.b16 %v327, %v326
        %v339 = vpack.c.b16 %v329, %v328
        %v340 = vpack.c.b16 %v331, %v330
        %v341 = vpack.c.b16 %v333, %v332
        %350 = vmatpush.bf16.msra.mxu0 %v341
        %351 = vmatpush.bf16.msra.mxu0 %v340
        %352 = vmatpush.bf16.msra.mxu0 %v339
        %353 = vmatpush.bf16.msra.mxu0 %v338
        %354 = vmatpush.bf16.msra.mxu0 %v337
        %355 = vmatpush.bf16.msra.mxu0 %v336
        %356 = vmatpush.bf16.msra.mxu0 %v335
        %357 = vmatpush.bf16.msra.mxu0 %v334
        %358 = vmatmul.bf16.gmra.mxu0 %v294
        %v359 = vpop.f32.mrf.mxu0
        %v360 = vadd.f32 0.0, %v359
        %v361 = vpop.f32.mrf.mxu0
        %v362 = vadd.f32 0.0, %v361
        %363 = vmatmul.bf16.gmra.mxu0 %v295
        %v364 = vpop.f32.mrf.mxu0
        %v365 = vadd.f32 0.0, %v364
        %v366 = vpop.f32.mrf.mxu0
        %v367 = vadd.f32 0.0, %v366
        %368 = vmatmul.bf16.gmra.mxu0 %v296
        %v369 = vpop.f32.mrf.mxu0
        %v370 = vadd.f32 0.0, %v369
        %v371 = vpop.f32.mrf.mxu0
        %v372 = vadd.f32 0.0, %v371
        %373 = vmatmul.bf16.gmra.mxu0 %v297
        %v374 = vpop.f32.mrf.mxu0
        %v375 = vadd.f32 0.0, %v374
        %v376 = vpop.f32.mrf.mxu0
        %v377 = vadd.f32 0.0, %v376
        %378 = vdwg.mxu0
        %v379 = vpack.c.bf16 %v360, %v360
        %v380 = vpack.c.bf16 %v362, %v362
        %v381 = vpack.c.bf16 %v365, %v365
        %v382 = vpack.c.bf16 %v367, %v367
        %v383 = vpack.c.bf16 %v370, %v370
        %v384 = vpack.c.bf16 %v372, %v372
        %v385 = vpack.c.bf16 %v375, %v375
        %v386 = vpack.c.bf16 %v377, %v377
        %s387 = scalar_lea.vmem [#allocation2], 32
        %388 = vst [vmem:[%s387] sm:$0xf] %v379
        %389 = vst [vmem:[%s387 + $0x4] sm:$0xf] %v380
        %390 = vst [vmem:[%s387 + $0x8] sm:$0xf] %v381
        %391 = vst [vmem:[%s387 + $0xc] sm:$0xf] %v382
        %392 = vst [vmem:[%s387 + $0x10] sm:$0xf] %v383
        %393 = vst [vmem:[%s387 + $0x14] sm:$0xf] %v384
        %394 = vst [vmem:[%s387 + $0x18] sm:$0xf] %v385
        %395 = vst [vmem:[%s387 + $0x1c] sm:$0xf] %v386
        %v404 = vunpack.c.l.b16 %v379
        %v405 = vunpack.c.l.b16 %v380
        %v406 = vunpack.c.l.b16 %v381
        %v407 = vunpack.c.l.b16 %v382
        %v408 = vunpack.c.l.b16 %v383
        %v409 = vunpack.c.l.b16 %v384
        %v410 = vunpack.c.l.b16 %v385
        %v411 = vunpack.c.l.b16 %v386
        %v412 = vpack.c.b16 %v405, %v404
        %v413 = vpack.c.b16 %v407, %v406
        %v414 = vpack.c.b16 %v409, %v408
        %v415 = vpack.c.b16 %v411, %v410
        %420 = vmatpush.bf16.msra.mxu0 %v341
        %421 = vmatpush.bf16.msra.mxu0 %v340
        %422 = vmatpush.bf16.msra.mxu0 %v339
        %423 = vmatpush.bf16.msra.mxu0 %v338
        %424 = vmatpush.bf16.msra.mxu0 %v337
        %425 = vmatpush.bf16.msra.mxu0 %v336
        %426 = vmatpush.bf16.msra.mxu0 %v335
        %427 = vmatpush.bf16.msra.mxu0 %v334
        %428 = vmatmul.bf16.gmra.mxu0 %v412
        %v429 = vpop.f32.mrf.mxu0
        %v430 = vadd.f32 0.0, %v429
        %v431 = vpop.f32.mrf.mxu0
        %v432 = vadd.f32 0.0, %v431
        %433 = vmatmul.bf16.gmra.mxu0 %v413
        %v434 = vpop.f32.mrf.mxu0
        %v435 = vadd.f32 0.0, %v434
        %v436 = vpop.f32.mrf.mxu0
        %v437 = vadd.f32 0.0, %v436
        %438 = vmatmul.bf16.gmra.mxu0 %v414
        %v439 = vpop.f32.mrf.mxu0
        %v440 = vadd.f32 0.0, %v439
        %v441 = vpop.f32.mrf.mxu0
        %v442 = vadd.f32 0.0, %v441
        %443 = vmatmul.bf16.gmra.mxu0 %v415
        %v444 = vpop.f32.mrf.mxu0
        %v445 = vadd.f32 0.0, %v444
        %v446 = vpop.f32.mrf.mxu0
        %v447 = vadd.f32 0.0, %v446
        %448 = vdwg.mxu0
        %v449 = vmul.f32 %v430, 2.0
        %v450 = vmul.f32 %v432, 2.0
        %v451 = vmul.f32 %v435, 2.0
        %v452 = vmul.f32 %v437, 2.0
        %v453 = vmul.f32 %v440, 2.0
        %v454 = vmul.f32 %v442, 2.0
        %v455 = vmul.f32 %v445, 2.0
        %v456 = vmul.f32 %v447, 2.0
        %v457 = vsub.f32 %v449, %v254
        %v458 = vsub.f32 %v450, %v255
        %v459 = vsub.f32 %v451, %v256
        %v460 = vsub.f32 %v452, %v257
        %v461 = vsub.f32 %v453, %v258
        %v462 = vsub.f32 %v454, %v259
        %v463 = vsub.f32 %v455, %v260
        %v464 = vsub.f32 %v456, %v261
        %v465 = vpack.c.bf16 %v457, %v457
        %v466 = vpack.c.bf16 %v458, %v458
        %v467 = vpack.c.bf16 %v459, %v459
        %v468 = vpack.c.bf16 %v460, %v460
        %v469 = vpack.c.bf16 %v461, %v461
        %v470 = vpack.c.bf16 %v462, %v462
        %v471 = vpack.c.bf16 %v463, %v463
        %v472 = vpack.c.bf16 %v464, %v464
        %s473 = scalar_lea.vmem [#allocation2], 64
        %474 = vst [vmem:[%s473] sm:$0xf] %v465
        %475 = vst [vmem:[%s473 + $0x4] sm:$0xf] %v466
        %476 = vst [vmem:[%s473 + $0x8] sm:$0xf] %v467
        %477 = vst [vmem:[%s473 + $0xc] sm:$0xf] %v468
        %478 = vst [vmem:[%s473 + $0x10] sm:$0xf] %v469
        %479 = vst [vmem:[%s473 + $0x14] sm:$0xf] %v470
        %480 = vst [vmem:[%s473 + $0x18] sm:$0xf] %v471
        %481 = vst [vmem:[%s473 + $0x1c] sm:$0xf] %v472
        %s482 = scalar_lea.vmem [#allocation6], 64
        %v483 = vld [vmem:[%s482] sm:$0xf]
        %v484 = vld [vmem:[%s482 + $0x4] sm:$0xf]
        %v485 = vld [vmem:[%s482 + $0x8] sm:$0xf]
        %v486 = vld [vmem:[%s482 + $0xc] sm:$0xf]
        %v487 = vld [vmem:[%s482 + $0x10] sm:$0xf]
        %v488 = vld [vmem:[%s482 + $0x14] sm:$0xf]
        %v489 = vld [vmem:[%s482 + $0x18] sm:$0xf]
        %v490 = vld [vmem:[%s482 + $0x1c] sm:$0xf]
        %v491 = vld [vmem:[%s482 + $0x20] sm:$0xf]
        %v492 = vld [vmem:[%s482 + $0x24] sm:$0xf]
        %v493 = vld [vmem:[%s482 + $0x28] sm:$0xf]
        %v494 = vld [vmem:[%s482 + $0x2c] sm:$0xf]
        %v495 = vld [vmem:[%s482 + $0x30] sm:$0xf]
        %v496 = vld [vmem:[%s482 + $0x34] sm:$0xf]
        %v497 = vld [vmem:[%s482 + $0x38] sm:$0xf]
        %v498 = vld [vmem:[%s482 + $0x3c] sm:$0xf]
        %v515 = vunpack.c.l.b16 %v483
        %v516 = vunpack.c.l.b16 %v484
        %v517 = vunpack.c.l.b16 %v485
        %v518 = vunpack.c.l.b16 %v486
        %v519 = vunpack.c.l.b16 %v487
        %v520 = vunpack.c.l.b16 %v488
        %v521 = vunpack.c.l.b16 %v489
        %v522 = vunpack.c.l.b16 %v490
        %v523 = vunpack.c.l.b16 %v491
        %v524 = vunpack.c.l.b16 %v492
        %v525 = vunpack.c.l.b16 %v493
        %v526 = vunpack.c.l.b16 %v494
        %v527 = vunpack.c.l.b16 %v495
        %v528 = vunpack.c.l.b16 %v496
        %v529 = vunpack.c.l.b16 %v497
        %v530 = vunpack.c.l.b16 %v498
        %v531 = vpack.c.b16 %v516, %v515
        %v532 = vpack.c.b16 %v518, %v517
        %v533 = vpack.c.b16 %v520, %v519
        %v534 = vpack.c.b16 %v522, %v521
        %v535 = vpack.c.b16 %v524, %v523
        %v536 = vpack.c.b16 %v526, %v525
        %v537 = vpack.c.b16 %v528, %v527
        %v538 = vpack.c.b16 %v530, %v529
        %547 = vmatpush.bf16.msra.mxu0 %v538
        %548 = vmatpush.bf16.msra.mxu0 %v537
        %549 = vmatpush.bf16.msra.mxu0 %v536
        %550 = vmatpush.bf16.msra.mxu0 %v535
        %551 = vmatpush.bf16.msra.mxu0 %v534
        %552 = vmatpush.bf16.msra.mxu0 %v533
        %553 = vmatpush.bf16.msra.mxu0 %v532
        %554 = vmatpush.bf16.msra.mxu0 %v531
        %555 = vmatmul.bf16.gmra.mxu0 %v294
        %v556 = vpop.f32.mrf.mxu0
        %v557 = vadd.f32 0.0, %v556
        %v558 = vpop.f32.mrf.mxu0
        %v559 = vadd.f32 0.0, %v558
        %560 = vmatmul.bf16.gmra.mxu0 %v295
        %v561 = vpop.f32.mrf.mxu0
        %v562 = vadd.f32 0.0, %v561
        %v563 = vpop.f32.mrf.mxu0
        %v564 = vadd.f32 0.0, %v563
        %565 = vmatmul.bf16.gmra.mxu0 %v296
        %v566 = vpop.f32.mrf.mxu0
        %v567 = vadd.f32 0.0, %v566
        %v568 = vpop.f32.mrf.mxu0
        %v569 = vadd.f32 0.0, %v568
        %570 = vmatmul.bf16.gmra.mxu0 %v297
        %v571 = vpop.f32.mrf.mxu0
        %v572 = vadd.f32 0.0, %v571
        %v573 = vpop.f32.mrf.mxu0
        %v574 = vadd.f32 0.0, %v573
        %575 = vdwg.mxu0
        %v576 = vpack.c.bf16 %v557, %v557
        %v577 = vpack.c.bf16 %v559, %v559
        %v578 = vpack.c.bf16 %v562, %v562
        %v579 = vpack.c.bf16 %v564, %v564
        %v580 = vpack.c.bf16 %v567, %v567
        %v581 = vpack.c.bf16 %v569, %v569
        %v582 = vpack.c.bf16 %v572, %v572
        %v583 = vpack.c.bf16 %v574, %v574
        %s584 = scalar_lea.vmem [#allocation2], 96
        %585 = vst [vmem:[%s584] sm:$0xf] %v576
        %586 = vst [vmem:[%s584 + $0x4] sm:$0xf] %v577
        %587 = vst [vmem:[%s584 + $0x8] sm:$0xf] %v578
        %588 = vst [vmem:[%s584 + $0xc] sm:$0xf] %v579
        %589 = vst [vmem:[%s584 + $0x10] sm:$0xf] %v580
        %590 = vst [vmem:[%s584 + $0x14] sm:$0xf] %v581
        %591 = vst [vmem:[%s584 + $0x18] sm:$0xf] %v582
        %592 = vst [vmem:[%s584 + $0x1c] sm:$0xf] %v583
        %v601 = vunpack.c.l.b16 %v576
        %v602 = vunpack.c.l.b16 %v577
        %v603 = vunpack.c.l.b16 %v578
        %v604 = vunpack.c.l.b16 %v579
        %v605 = vunpack.c.l.b16 %v580
        %v606 = vunpack.c.l.b16 %v581
        %v607 = vunpack.c.l.b16 %v582
        %v608 = vunpack.c.l.b16 %v583
        %v609 = vpack.c.b16 %v602, %v601
        %v610 = vpack.c.b16 %v604, %v603
        %v611 = vpack.c.b16 %v606, %v605
        %v612 = vpack.c.b16 %v608, %v607
        %617 = vmatpush.bf16.msra.mxu0 %v538
        %618 = vmatpush.bf16.msra.mxu0 %v537
        %619 = vmatpush.bf16.msra.mxu0 %v536
        %620 = vmatpush.bf16.msra.mxu0 %v535
        %621 = vmatpush.bf16.msra.mxu0 %v534
        %622 = vmatpush.bf16.msra.mxu0 %v533
        %623 = vmatpush.bf16.msra.mxu0 %v532
        %624 = vmatpush.bf16.msra.mxu0 %v531
        %625 = vmatmul.bf16.gmra.mxu0 %v609
        %v626 = vpop.f32.mrf.mxu0
        %v627 = vadd.f32 0.0, %v626
        %v628 = vpop.f32.mrf.mxu0
        %v629 = vadd.f32 0.0, %v628
        %630 = vmatmul.bf16.gmra.mxu0 %v610
        %v631 = vpop.f32.mrf.mxu0
        %v632 = vadd.f32 0.0, %v631
        %v633 = vpop.f32.mrf.mxu0
        %v634 = vadd.f32 0.0, %v633
        %635 = vmatmul.bf16.gmra.mxu0 %v611
        %v636 = vpop.f32.mrf.mxu0
        %v637 = vadd.f32 0.0, %v636
        %v638 = vpop.f32.mrf.mxu0
        %v639 = vadd.f32 0.0, %v638
        %640 = vmatmul.bf16.gmra.mxu0 %v612
        %v641 = vpop.f32.mrf.mxu0
        %v642 = vadd.f32 0.0, %v641
        %v643 = vpop.f32.mrf.mxu0
        %v644 = vadd.f32 0.0, %v643
        %645 = vdwg.mxu0
        %v646 = vmul.f32 %v627, 2.0
        %v647 = vmul.f32 %v629, 2.0
        %v648 = vmul.f32 %v632, 2.0
        %v649 = vmul.f32 %v634, 2.0
        %v650 = vmul.f32 %v637, 2.0
        %v651 = vmul.f32 %v639, 2.0
        %v652 = vmul.f32 %v642, 2.0
        %v653 = vmul.f32 %v644, 2.0
        %v654 = vsub.f32 %v646, %v254
        %v655 = vsub.f32 %v647, %v255
        %v656 = vsub.f32 %v648, %v256
        %v657 = vsub.f32 %v649, %v257
        %v658 = vsub.f32 %v650, %v258
        %v659 = vsub.f32 %v651, %v259
        %v660 = vsub.f32 %v652, %v260
        %v661 = vsub.f32 %v653, %v261
        %v662 = vpack.c.bf16 %v654, %v654
        %v663 = vpack.c.bf16 %v655, %v655
        %v664 = vpack.c.bf16 %v656, %v656
        %v665 = vpack.c.bf16 %v657, %v657
        %v666 = vpack.c.bf16 %v658, %v658
        %v667 = vpack.c.bf16 %v659, %v659
        %v668 = vpack.c.bf16 %v660, %v660
        %v669 = vpack.c.bf16 %v661, %v661
        %s670 = scalar_lea.vmem [#allocation2], 128
        %671 = vst [vmem:[%s670] sm:$0xf] %v662
        %672 = vst [vmem:[%s670 + $0x4] sm:$0xf] %v663
        %673 = vst [vmem:[%s670 + $0x8] sm:$0xf] %v664
        %674 = vst [vmem:[%s670 + $0xc] sm:$0xf] %v665
        %675 = vst [vmem:[%s670 + $0x10] sm:$0xf] %v666
        %676 = vst [vmem:[%s670 + $0x14] sm:$0xf] %v667
        %677 = vst [vmem:[%s670 + $0x18] sm:$0xf] %v668
        %678 = vst [vmem:[%s670 + $0x1c] sm:$0xf] %v669
        %v679 = vld [vmem:[%s2] sm:$0xf]
        %v680 = vld [vmem:[%s3] sm:$0xff]
        %v681 = vld [vmem:[#allocation2] sm:$0xf]
        %v682 = vld [vmem:[#allocation2 + $0x20] sm:$0xf]
        %v683 = vld [vmem:[#allocation2 + $0x40] sm:$0xf]
        %v684 = vld [vmem:[#allocation2 + $0x60] sm:$0xf]
        %v685 = vld [vmem:[#allocation2 + $0x80] sm:$0xf]
        %687 = vset.pattern.permute.xlu0 0
        %688 = vperm.xlu0 %687, %v680
        %v689 = vpop.permute.xlu0 %688
        %v696 = vunpack.c.l.b16 %v681
        %v697 = vunpack.c.l.b16 %v682
        %v698 = vunpack.c.l.b16 %v683
        %v699 = vunpack.c.l.b16 %v684
        %v700 = vunpack.c.l.b16 %v685
        %v701 = vpack.c.b16 %v697, %v696
        %v702 = vpack.c.b16 %v699, %v698
        %v703 = vpack.c.b16 %v700, %v700
        %vm706 = vcmask 326656
        %v708 = vsel %vm706, %v679, 0
        %vm710 = vcmask 1043456
        %v712 = vsel %vm710, %v703, 0
        %714 = vmatpush.bf16.msra.mxu0 0
        %715 = vmatpush.bf16.msra.mxu0 0
        %716 = vmatpush.bf16.msra.mxu0 0
        %717 = vmatpush.bf16.msra.mxu0 0
        %718 = vmatpush.bf16.msra.mxu0 0
        %719 = vmatpush.bf16.msra.mxu0 %v712
        %720 = vmatpush.bf16.msra.mxu0 %v702
        %721 = vmatpush.bf16.msra.mxu0 %v701
        %722 = vmatmul.bf16.gmra.mxu0 %v708
        %v723 = vpop.f32.mrf.mxu0
        %v724 = vadd.f32 %v689, %v723
        %v725 = vpop.f32.mrf.mxu0
        %726 = vdwg.mxu0
        %727 = vst [vmem:[%s234] sm:$0xff] %v724
        %v728 = vld [vmem:[#allocation2 + $0x4] sm:$0xf]
        %v729 = vld [vmem:[#allocation2 + $0x24] sm:$0xf]
        %v730 = vld [vmem:[#allocation2 + $0x44] sm:$0xf]
        %v731 = vld [vmem:[#allocation2 + $0x64] sm:$0xf]
        %v732 = vld [vmem:[#allocation2 + $0x84] sm:$0xf]
        %v738 = vunpack.c.l.b16 %v728
        %v739 = vunpack.c.l.b16 %v729
        %v740 = vunpack.c.l.b16 %v730
        %v741 = vunpack.c.l.b16 %v731
        %v742 = vunpack.c.l.b16 %v732
        %v743 = vpack.c.b16 %v739, %v738
        %v744 = vpack.c.b16 %v741, %v740
        %v745 = vpack.c.b16 %v742, %v742
        %v749 = vsel %vm710, %v745, 0
        %751 = vmatpush.bf16.msra.mxu0 0
        %752 = vmatpush.bf16.msra.mxu0 0
        %753 = vmatpush.bf16.msra.mxu0 0
        %754 = vmatpush.bf16.msra.mxu0 0
        %755 = vmatpush.bf16.msra.mxu0 0
        %756 = vmatpush.bf16.msra.mxu0 %v749
        %757 = vmatpush.bf16.msra.mxu0 %v744
        %758 = vmatpush.bf16.msra.mxu0 %v743
        %759 = vmatmul.bf16.gmra.mxu0 %v708
        %v760 = vpop.f32.mrf.mxu0
        %v761 = vadd.f32 %v689, %v760
        %v762 = vpop.f32.mrf.mxu0
        %763 = vdwg.mxu0
        %s764 = scalar_lea.vmem %s234, 8 [#allocation8]
        %765 = vst [vmem:[%s764] sm:$0xff] %v761
        %v766 = vld [vmem:[#allocation2 + $0x8] sm:$0xf]
        %v767 = vld [vmem:[#allocation2 + $0x28] sm:$0xf]
        %v768 = vld [vmem:[#allocation2 + $0x48] sm:$0xf]
        %v769 = vld [vmem:[#allocation2 + $0x68] sm:$0xf]
        %v770 = vld [vmem:[#allocation2 + $0x88] sm:$0xf]
        %v776 = vunpack.c.l.b16 %v766
        %v777 = vunpack.c.l.b16 %v767
        %v778 = vunpack.c.l.b16 %v768
        %v779 = vunpack.c.l.b16 %v769
        %v780 = vunpack.c.l.b16 %v770
        %v781 = vpack.c.b16 %v777, %v776
        %v782 = vpack.c.b16 %v779, %v778
        %v783 = vpack.c.b16 %v780, %v780
        %v787 = vsel %vm710, %v783, 0
        %789 = vmatpush.bf16.msra.mxu0 0
        %790 = vmatpush.bf16.msra.mxu0 0
        %791 = vmatpush.bf16.msra.mxu0 0
        %792 = vmatpush.bf16.msra.mxu0 0
        %793 = vmatpush.bf16.msra.mxu0 0
        %794 = vmatpush.bf16.msra.mxu0 %v787
        %795 = vmatpush.bf16.msra.mxu0 %v782
        %796 = vmatpush.bf16.msra.mxu0 %v781
        %797 = vmatmul.bf16.gmra.mxu0 %v708
        %v798 = vpop.f32.mrf.mxu0
        %v799 = vadd.f32 %v689, %v798
        %v800 = vpop.f32.mrf.mxu0
        %801 = vdwg.mxu0
        %s802 = scalar_lea.vmem %s234, 16 [#allocation8]
        %803 = vst [vmem:[%s802] sm:$0xff] %v799
        %v804 = vld [vmem:[#allocation2 + $0xc] sm:$0xf]
        %v805 = vld [vmem:[#allocation2 + $0x2c] sm:$0xf]
        %v806 = vld [vmem:[#allocation2 + $0x4c] sm:$0xf]
        %v807 = vld [vmem:[#allocation2 + $0x6c] sm:$0xf]
        %v808 = vld [vmem:[#allocation2 + $0x8c] sm:$0xf]
        %v814 = vunpack.c.l.b16 %v804
        %v815 = vunpack.c.l.b16 %v805
        %v816 = vunpack.c.l.b16 %v806
        %v817 = vunpack.c.l.b16 %v807
        %v818 = vunpack.c.l.b16 %v808
        %v819 = vpack.c.b16 %v815, %v814
        %v820 = vpack.c.b16 %v817, %v816
        %v821 = vpack.c.b16 %v818, %v818
        %v825 = vsel %vm710, %v821, 0
        %827 = vmatpush.bf16.msra.mxu0 0
        %828 = vmatpush.bf16.msra.mxu0 0
        %829 = vmatpush.bf16.msra.mxu0 0
        %830 = vmatpush.bf16.msra.mxu0 0
        %831 = vmatpush.bf16.msra.mxu0 0
        %832 = vmatpush.bf16.msra.mxu0 %v825
        %833 = vmatpush.bf16.msra.mxu0 %v820
        %834 = vmatpush.bf16.msra.mxu0 %v819
        %835 = vmatmul.bf16.gmra.mxu0 %v708
        %v836 = vpop.f32.mrf.mxu0
        %v837 = vadd.f32 %v689, %v836
        %v838 = vpop.f32.mrf.mxu0
        %839 = vdwg.mxu0
        %s840 = scalar_lea.vmem %s234, 24 [#allocation8]
        %841 = vst [vmem:[%s840] sm:$0xff] %v837
        %v842 = vld [vmem:[#allocation2 + $0x10] sm:$0xf]
        %v843 = vld [vmem:[#allocation2 + $0x30] sm:$0xf]
        %v844 = vld [vmem:[#allocation2 + $0x50] sm:$0xf]
        %v845 = vld [vmem:[#allocation2 + $0x70] sm:$0xf]
        %v846 = vld [vmem:[#allocation2 + $0x90] sm:$0xf]
        %v852 = vunpack.c.l.b16 %v842
        %v853 = vunpack.c.l.b16 %v843
        %v854 = vunpack.c.l.b16 %v844
        %v855 = vunpack.c.l.b16 %v845
        %v856 = vunpack.c.l.b16 %v846
        %v857 = vpack.c.b16 %v853, %v852
        %v858 = vpack.c.b16 %v855, %v854
        %v859 = vpack.c.b16 %v856, %v856
        %v863 = vsel %vm710, %v859, 0
        %865 = vmatpush.bf16.msra.mxu0 0
        %866 = vmatpush.bf16.msra.mxu0 0
        %867 = vmatpush.bf16.msra.mxu0 0
        %868 = vmatpush.bf16.msra.mxu0 0
        %869 = vmatpush.bf16.msra.mxu0 0
        %870 = vmatpush.bf16.msra.mxu0 %v863
        %871 = vmatpush.bf16.msra.mxu0 %v858
        %872 = vmatpush.bf16.msra.mxu0 %v857
        %873 = vmatmul.bf16.gmra.mxu0 %v708
        %v874 = vpop.f32.mrf.mxu0
        %v875 = vadd.f32 %v689, %v874
        %v876 = vpop.f32.mrf.mxu0
        %877 = vdwg.mxu0
        %s878 = scalar_lea.vmem %s234, 32 [#allocation8]
        %879 = vst [vmem:[%s878] sm:$0xff] %v875
        %v880 = vld [vmem:[#allocation2 + $0x14] sm:$0xf]
        %v881 = vld [vmem:[#allocation2 + $0x34] sm:$0xf]
        %v882 = vld [vmem:[#allocation2 + $0x54] sm:$0xf]
        %v883 = vld [vmem:[#allocation2 + $0x74] sm:$0xf]
        %v884 = vld [vmem:[#allocation2 + $0x94] sm:$0xf]
        %v890 = vunpack.c.l.b16 %v880
        %v891 = vunpack.c.l.b16 %v881
        %v892 = vunpack.c.l.b16 %v882
        %v893 = vunpack.c.l.b16 %v883
        %v894 = vunpack.c.l.b16 %v884
        %v895 = vpack.c.b16 %v891, %v890
        %v896 = vpack.c.b16 %v893, %v892
        %v897 = vpack.c.b16 %v894, %v894
        %v901 = vsel %vm710, %v897, 0
        %903 = vmatpush.bf16.msra.mxu0 0
        %904 = vmatpush.bf16.msra.mxu0 0
        %905 = vmatpush.bf16.msra.mxu0 0
        %906 = vmatpush.bf16.msra.mxu0 0
        %907 = vmatpush.bf16.msra.mxu0 0
        %908 = vmatpush.bf16.msra.mxu0 %v901
        %909 = vmatpush.bf16.msra.mxu0 %v896
        %910 = vmatpush.bf16.msra.mxu0 %v895
        %911 = vmatmul.bf16.gmra.mxu0 %v708
        %v912 = vpop.f32.mrf.mxu0
        %v913 = vadd.f32 %v689, %v912
        %v914 = vpop.f32.mrf.mxu0
        %915 = vdwg.mxu0
        %s916 = scalar_lea.vmem %s234, 40 [#allocation8]
        %917 = vst [vmem:[%s916] sm:$0xff] %v913
        %v918 = vld [vmem:[#allocation2 + $0x18] sm:$0xf]
        %v919 = vld [vmem:[#allocation2 + $0x38] sm:$0xf]
        %v920 = vld [vmem:[#allocation2 + $0x58] sm:$0xf]
        %v921 = vld [vmem:[#allocation2 + $0x78] sm:$0xf]
        %v922 = vld [vmem:[#allocation2 + $0x98] sm:$0xf]
        %v928 = vunpack.c.l.b16 %v918
        %v929 = vunpack.c.l.b16 %v919
        %v930 = vunpack.c.l.b16 %v920
        %v931 = vunpack.c.l.b16 %v921
        %v932 = vunpack.c.l.b16 %v922
        %v933 = vpack.c.b16 %v929, %v928
        %v934 = vpack.c.b16 %v931, %v930
        %v935 = vpack.c.b16 %v932, %v932
        %v939 = vsel %vm710, %v935, 0
        %941 = vmatpush.bf16.msra.mxu0 0
        %942 = vmatpush.bf16.msra.mxu0 0
        %943 = vmatpush.bf16.msra.mxu0 0
        %944 = vmatpush.bf16.msra.mxu0 0
        %945 = vmatpush.bf16.msra.mxu0 0
        %946 = vmatpush.bf16.msra.mxu0 %v939
        %947 = vmatpush.bf16.msra.mxu0 %v934
        %948 = vmatpush.bf16.msra.mxu0 %v933
        %949 = vmatmul.bf16.gmra.mxu0 %v708
        %v950 = vpop.f32.mrf.mxu0
        %v951 = vadd.f32 %v689, %v950
        %v952 = vpop.f32.mrf.mxu0
        %953 = vdwg.mxu0
        %s954 = scalar_lea.vmem %s234, 48 [#allocation8]
        %955 = vst [vmem:[%s954] sm:$0xff] %v951
        %v956 = vld [vmem:[#allocation2 + $0x1c] sm:$0xf]
        %v957 = vld [vmem:[#allocation2 + $0x3c] sm:$0xf]
        %v958 = vld [vmem:[#allocation2 + $0x5c] sm:$0xf]
        %v959 = vld [vmem:[#allocation2 + $0x7c] sm:$0xf]
        %v960 = vld [vmem:[#allocation2 + $0x9c] sm:$0xf]
        %v966 = vunpack.c.l.b16 %v956
        %v967 = vunpack.c.l.b16 %v957
        %v968 = vunpack.c.l.b16 %v958
        %v969 = vunpack.c.l.b16 %v959
        %v970 = vunpack.c.l.b16 %v960
        %v971 = vpack.c.b16 %v967, %v966
        %v972 = vpack.c.b16 %v969, %v968
        %v973 = vpack.c.b16 %v970, %v970
        %v977 = vsel %vm710, %v973, 0
        %979 = vmatpush.bf16.msra.mxu0 0
        %980 = vmatpush.bf16.msra.mxu0 0
        %981 = vmatpush.bf16.msra.mxu0 0
        %982 = vmatpush.bf16.msra.mxu0 0
        %983 = vmatpush.bf16.msra.mxu0 0
        %984 = vmatpush.bf16.msra.mxu0 %v977
        %985 = vmatpush.bf16.msra.mxu0 %v972
        %986 = vmatpush.bf16.msra.mxu0 %v971
        %987 = vmatmul.bf16.gmra.mxu0 %v708
        %v988 = vpop.f32.mrf.mxu0
        %v989 = vadd.f32 %v689, %v988
        %v990 = vpop.f32.mrf.mxu0
        %991 = vdwg.mxu0
        %s992 = scalar_lea.vmem %s234, 56 [#allocation8]
        %993 = vst [vmem:[%s992] sm:$0xff] %v989
        %s994 = sand.u32 %s119, 1
        %s995 = scalar_lea.sflag [#allocation5], %s994
        %s996 = sand.u32 %s119, 1
        %s997 = smul.addr %s996, 64
        %s998 = scalar_lea.vmem [#allocation8], %s997
        // Predicated region
        $region45: #{tpu_custom_call.1} parent=35 // pred_check
          %p999 = pneg %p129
        $region46: #{tpu_custom_call.1} parent=35 // pred_check_branch
          %1001 = sbr.rel (%p999) target = $region48
        $region47: #{tpu_custom_call.1} parent=35 // pred_region
          %s1002 = smul.u32 8, %s22
          %1004 = vsyncadd %s995, 0
          %s1005 = smul.addr %s1002, 8
          %s1006 = scalar_lea.hbm %s4, %s1005
          %s1007 = sshll.u32 %s998, 4
          %s1008 = int_to_ptr.vmem [resolvable:$true] %s1007
          %s1009 = sshll.u32 %s1006, 4
          %s1010 = int_to_ptr.hbm [resolvable:$true] %s1009
          %1015 = dma.vmem_to_hbm [thread:$0]  %s1008, 1024, %s1010, %s995, 128, 128, 8
        $region48: #{tpu_custom_call.1} parent=35 // pred_fallthru
          _
      $region36: #{tpu_custom_call.1} parent=5 // pred_fallthru
        _
      %p1016 = scmp.le.s32.totalorder 2, %s17
      // Predicated region
      $region49: #{tpu_custom_call.1} parent=5 // pred_check
        %p1017 = pneg %p1016
      $region50: #{tpu_custom_call.1} parent=5 // pred_check_branch
        %1019 = sbr.rel (%p1017) target = $region52
      $region51: #{tpu_custom_call.1} parent=5 // pred_region
        %s1020 = ssub.s32 %s17, 2
        // Predicated region
        $region53: #{tpu_custom_call.1} parent=51 // pred_check
          %p1021 = pneg %p135
        $region54: #{tpu_custom_call.1} parent=51 // pred_check_branch
          %1023 = sbr.rel (%p1021) target = $region56
        $region55: #{tpu_custom_call.1} parent=51 // pred_region
          %s1024 = sand.u32 %s120, 1
          %s1025 = scalar_lea.sflag [#allocation5], %s1024
          %s1026 = sand.u32 %s120, 1
          %s1027 = smul.addr %s1026, 64
          %s1028 = scalar_lea.vmem [#allocation8], %s1027
          %1030 = dma.done %s1025, 1024
        $region56: #{tpu_custom_call.1} parent=51 // pred_fallthru
          _
      $region52: #{tpu_custom_call.1} parent=5 // pred_fallthru
        _
    $region6: #{tpu_custom_call.1} parent=1 // loop_footer
      %s21 = sadd.s32 1, %s17
    $region7: #{tpu_custom_call.1} parent=1 // loop_footer_branch
      %16 = sbr.rel target = $region3
    $region8: #{tpu_custom_call.1} parent=1 // loop_exit
      _
    %1031 = vsyncpa [#allocation4], 1
    %s1032 = scalar_lea.sflag [#allocation4], 1
    %1033 = vsyncpa %s1032, 1
    %1034 = vsyncpa [#allocation7], 1
    %1035 = vsyncpa [#allocation5], 1
    %s1036 = scalar_lea.sflag [#allocation5], 1
    %1037 = vsyncpa %s1036, 1

// kernel: tpu_custom_call.1
$region0: #{tpu_custom_call.1}
  #allocation0 [shape = 'u32[]', space=smem, size = 0x4, offset = 0x4, fixed_abs, tag = 'smem constant byte address 0x4 - core index']
  #allocation1 [shape = 'u32[72,128]{1,0:T(1,128)}', space=vmem, size = 0x9000, scoped, tag = 'internal scratch']
  #allocation2 [shape = 'bf16[5,64,128]{2,1,0:T(8,128)(2,1)}', space=vmem, size = 0x14000, scoped, tag = 'scratch operand']
  %s0 = inlined_call_operand.hbm [shape: bf16[128,128], index: 0, kind: input, shape index: {}]
  %s1 = inlined_call_operand.hbm [shape: bf16[2,128,128], index: 1, kind: input, shape index: {}]
  %s2 = inlined_call_operand.vmem [shape: bf16[8,40], index: 2, kind: input, shape index: {}]
  %s3 = inlined_call_operand.vmem [shape: f32[8,1], index: 3, kind: input, shape index: {}]
  %s4 = inlined_call_operand.hbm [shape: f32[16,8,128], index: 4, kind: output, shape index: {}]
  %s5 = sld [smem:[#allocation0]]
  $region57: #{tpu_custom_call.1} parent=0
    _
  %s7 = ssub.s32 1, %s5
  %s8 = scalar_select 0, %s7, %s5
  $region1: #{tpu_custom_call.1} parent=0
    #allocation3 [shape = 'u8[32768]{0}', space=vmem, size = 0x8000, scoped, tag = 'input window, operand 0']
    #allocation4 [shape = 's32[2]{0}', space=sflag, size = 0x8, scoped, tag = 'scoped memory for tpu_custom_call.1']
    #allocation5 [shape = 's32[2]{0}', space=sflag, size = 0x8, scoped, tag = 'scoped memory for tpu_custom_call.1']
    #allocation6 [shape = 'u8[65536]{0}', space=vmem, size = 0x10000, scoped, tag = 'input window, operand 1, single buffered']
    #allocation7 [shape = 's32[1]{0}', space=sflag, size = 0x4, scoped, tag = 'scoped memory for tpu_custom_call.1']
    #allocation8 [shape = 'u8[65536]{0}', space=vmem, size = 0x10000, scoped, tag = 'output window, operand 0']
    %9 = vsyncpa [#allocation4], 0
    %s10 = scalar_lea.sflag [#allocation4], 1
    %11 = vsyncpa %s10, 0
    %12 = vsyncpa [#allocation7], 0
    %13 = vsyncpa [#allocation5], 0
    %s14 = scalar_lea.sflag [#allocation5], 1
    %15 = vsyncpa %s14, 0
    loop: start=0, step=1, limit=4
    $region2: #{tpu_custom_call.1} parent=1 // loop_pre_header
      _
    $region3: #{tpu_custom_call.1} parent=1 // loop_header
      %s17 = sphi 0, %s21
      %p18 = scmp.ge.s32.totalorder %s17, 4
      %s27 = sphi 0, %s29
      %s30 = sphi 0, %s27
      %s31 = sphi 0, %s30
      %s47 = sphi 0, %s31
      %s51 = sphi 0, %s51
      %s53 = sphi 0, %s51
      %s54 = sphi 0, %s53
      %s68 = sphi 0, %s54
      %s72 = sphi 0, %s72
      %s74 = sphi 0, %s72
      %s75 = sphi 0, %s74
      %s89 = sphi 0, %s75
      %s93 = sphi 0, %s93
      %s95 = sphi 0, %s93
      %s96 = sphi 0, %s95
      %s110 = sphi 0, %s96
      %s116 = sphi 0, %s118
      %s119 = sphi 0, %s116
      %s120 = sphi 0, %s119
      %s136 = sphi 0, %s120
    $region4: #{tpu_custom_call.1} parent=1 // loop_header_branch
      %20 = sbr.rel (%p18) target = $region8
    $region5: #{tpu_custom_call.1} parent=1 // loop_body
      %s22 = ssub.s32 %s17, 1
      %s23 = ssub.s32 %s17, 2
      %s24 = sadd.s32 %s17, 1
      %s25 = ssub.s32 %s17, %s24
      %p26 = scmp.eq.s32.totalorder %s25, 0
      %s28 = sadd.s32 %s27, 1
      %s29 = scalar_select %p26, %s27, %s28
      %p32 = pneg %p26
      %p33 = scmp.eq.s32.totalorder %s17, 1
      %p34 = por %p32, %p33
      %p35 = scmp.ne.s32.totalorder %s27, %s30
      %p36 = scmp.eq.s32.totalorder %s17, 0
      %p37 = por %p35, %p36
      %p38 = scmp.ne.s32.totalorder %s27, %s30
      %p39 = scmp.eq.s32.totalorder %s22, 1
      %p40 = por %p38, %p39
      %p41 = scmp.ne.s32.totalorder %s30, %s31
      %p42 = scmp.eq.s32.totalorder %s22, 0
      %p43 = por %p41, %p42
      %p44 = scmp.ne.s32.totalorder %s30, %s31
      %p45 = scmp.eq.s32.totalorder %s23, 1
      %p46 = por %p44, %p45
      %p48 = scmp.ne.s32.totalorder %s31, %s47
      %p49 = scmp.eq.s32.totalorder %s23, 0
      %p50 = por %p48, %p49
      %s52 = sadd.s32 %s51, 1
      %p55 = scmp.eq.s32.totalorder %s17, 1
      %p56 = scmp.ne.s32.totalorder %s51, %s53
      %p57 = scmp.eq.s32.totalorder %s17, 0
      %p58 = por %p56, %p57
      %p59 = scmp.ne.s32.totalorder %s51, %s53
      %p60 = scmp.eq.s32.totalorder %s22, 1
      %p61 = por %p59, %p60
      %p62 = scmp.ne.s32.totalorder %s53, %s54
      %p63 = scmp.eq.s32.totalorder %s22, 0
      %p64 = por %p62, %p63
      %p65 = scmp.ne.s32.totalorder %s53, %s54
      %p66 = scmp.eq.s32.totalorder %s23, 1
      %p67 = por %p65, %p66
      %p69 = scmp.ne.s32.totalorder %s54, %s68
      %p70 = scmp.eq.s32.totalorder %s23, 0
      %p71 = por %p69, %p70
      %s73 = sadd.s32 %s72, 1
      %p76 = scmp.eq.s32.totalorder %s17, 1
      %p77 = scmp.ne.s32.totalorder %s72, %s74
      %p78 = scmp.eq.s32.totalorder %s17, 0
      %p79 = por %p77, %p78
      %p80 = scmp.ne.s32.totalorder %s72, %s74
      %p81 = scmp.eq.s32.totalorder %s22, 1
      %p82 = por %p80, %p81
      %p83 = scmp.ne.s32.totalorder %s74, %s75
      %p84 = scmp.eq.s32.totalorder %s22, 0
      %p85 = por %p83, %p84
      %p86 = scmp.ne.s32.totalorder %s74, %s75
      %p87 = scmp.eq.s32.totalorder %s23, 1
      %p88 = por %p86, %p87
      %p90 = scmp.ne.s32.totalorder %s75, %s89
      %p91 = scmp.eq.s32.totalorder %s23, 0
      %p92 = por %p90, %p91
      %s94 = sadd.s32 %s93, 1
      %p97 = scmp.eq.s32.totalorder %s17, 1
      %p98 = scmp.ne.s32.totalorder %s93, %s95
      %p99 = scmp.eq.s32.totalorder %s17, 0
      %p100 = por %p98, %p99
      %p101 = scmp.ne.s32.totalorder %s93, %s95
      %p102 = scmp.eq.s32.totalorder %s22, 1
      %p103 = por %p101, %p102
      %p104 = scmp.ne.s32.totalorder %s95, %s96
      %p105 = scmp.eq.s32.totalorder %s22, 0
      %p106 = por %p104, %p105
      %p107 = scmp.ne.s32.totalorder %s95, %s96
      %p108 = scmp.eq.s32.totalorder %s23, 1
      %p109 = por %p107, %p108
      %p111 = scmp.ne.s32.totalorder %s96, %s110
      %p112 = scmp.eq.s32.totalorder %s23, 0
      %p113 = por %p111, %p112
      %s114 = ssub.s32 %s17, %s24
      %p115 = scmp.eq.s32.totalorder %s114, 0
      %s117 = sadd.s32 %s116, 1
      %s118 = scalar_select %p115, %s116, %s117
      %p121 = pneg %p115
      %p122 = scmp.eq.s32.totalorder %s17, 1
      %p123 = por %p121, %p122
      %p124 = scmp.ne.s32.totalorder %s116, %s119
      %p125 = scmp.eq.s32.totalorder %s17, 0
      %p126 = por %p124, %p125
      %p127 = scmp.ne.s32.totalorder %s116, %s119
      %p128 = scmp.eq.s32.totalorder %s22, 1
      %p129 = por %p127, %p128
      %p130 = scmp.ne.s32.totalorder %s119, %s120
      %p131 = scmp.eq.s32.totalorder %s22, 0
      %p132 = por %p130, %p131
      %p133 = scmp.ne.s32.totalorder %s119, %s120
      %p134 = scmp.eq.s32.totalorder %s23, 1
      %p135 = por %p133, %p134
      %p137 = scmp.ne.s32.totalorder %s120, %s136
      %p138 = scmp.eq.s32.totalorder %s23, 0
      %p139 = por %p137, %p138
      %p140 = scmp.le.s32.totalorder 1, %s17
      %p141 = scmp.lt.s32.totalorder %s17, 3
      %p142 = pnand %p140, %p141
      %p143 = pneg %p142
      // Predicated region
      $region9: #{tpu_custom_call.1} parent=5 // pred_check
        _
      $region10: #{tpu_custom_call.1} parent=5 // pred_check_branch
        %145 = sbr.rel (%p142) target = $region12
      $region11: #{tpu_custom_call.1} parent=5 // pred_region
        %s146 = ssub.s32 %s17, 1
        // Predicated region
        $region13: #{tpu_custom_call.1} parent=11 // pred_check
          %p147 = pneg %p64
        $region14: #{tpu_custom_call.1} parent=11 // pred_check_branch
          %149 = sbr.rel (%p147) target = $region16
        $region15: #{tpu_custom_call.1} parent=11 // pred_region
          %151 = vsyncadd [#allocation7], 0
          %s152 = sshll.u32 %s1, 4
          %s153 = int_to_ptr.hbm [resolvable:$true] %s152
          %s154 = sshll.u32 [#allocation6], 4
          %s155 = int_to_ptr.vmem [resolvable:$true] %s154
          %160 = dma.hbm_to_vmem [thread:$0]  %s153, 2048, %s155, [#allocation7], 64, 64, 4
        $region16: #{tpu_custom_call.1} parent=11 // pred_fallthru
          _
        // Predicated region
        $region17: #{tpu_custom_call.1} parent=11 // pred_check
          %p161 = pneg %p85
        $region18: #{tpu_custom_call.1} parent=11 // pred_check_branch
          %163 = sbr.rel (%p161) target = $region20
        $region19: #{tpu_custom_call.1} parent=11 // pred_region
          _
        $region20: #{tpu_custom_call.1} parent=11 // pred_fallthru
          _
        // Predicated region
        $region21: #{tpu_custom_call.1} parent=11 // pred_check
          %p164 = pneg %p106
        $region22: #{tpu_custom_call.1} parent=11 // pred_check_branch
          %166 = sbr.rel (%p164) target = $region24
        $region23: #{tpu_custom_call.1} parent=11 // pred_region
          _
        $region24: #{tpu_custom_call.1} parent=11 // pred_fallthru
          _
      $region12: #{tpu_custom_call.1} parent=5 // pred_fallthru
        _
      %p167 = scmp.lt.s32.totalorder %s17, 2
      // Predicated region
      $region25: #{tpu_custom_call.1} parent=5 // pred_check
        %p168 = pneg %p167
      $region26: #{tpu_custom_call.1} parent=5 // pred_check_branch
        %170 = sbr.rel (%p168) target = $region28
      $region27: #{tpu_custom_call.1} parent=5 // pred_region
        // Predicated region
        $region29: #{tpu_custom_call.1} parent=27 // pred_check
          %p171 = pneg %p37
        $region30: #{tpu_custom_call.1} parent=27 // pred_check_branch
          %173 = sbr.rel (%p171) target = $region32
        $region31: #{tpu_custom_call.1} parent=27 // pred_region
          %s174 = sand.u32 %s27, 1
          %s175 = scalar_lea.sflag [#allocation4], %s174
          %s176 = sand.u32 %s27, 1
          %s177 = smul.addr %s176, 32
          %s178 = scalar_lea.vmem [#allocation3], %s177
          %s179 = smul.u32 8, %s17
          %181 = vsyncadd %s175, 0
          %s182 = smul.addr %s179, 4
          %s183 = scalar_lea.hbm %s0, %s182
          %s184 = sshll.u32 %s183, 4
          %s185 = int_to_ptr.hbm [resolvable:$true] %s184
          %s186 = sshll.u32 %s178, 4
          %s187 = int_to_ptr.vmem [resolvable:$true] %s186
          %192 = dma.hbm_to_vmem [thread:$0]  %s185, 512, %s187, %s175, 64, 64, 4
        $region32: #{tpu_custom_call.1} parent=27 // pred_fallthru
          _
      $region28: #{tpu_custom_call.1} parent=5 // pred_fallthru
        _
      %p193 = scmp.le.s32.totalorder 1, %s17
      %p194 = scmp.lt.s32.totalorder %s17, 3
      %p195 = pnand %p193, %p194
      %p196 = pneg %p195
      // Predicated region
      $region33: #{tpu_custom_call.1} parent=5 // pred_check
        _
      $region34: #{tpu_custom_call.1} parent=5 // pred_check_branch
        %198 = sbr.rel (%p195) target = $region36
      $region35: #{tpu_custom_call.1} parent=5 // pred_region
        %s199 = ssub.s32 %s17, 1
        %s200 = sand.u32 %s30, 1
        %s201 = scalar_lea.sflag [#allocation4], %s200
        %s202 = sand.u32 %s30, 1
        %s203 = smul.addr %s202, 32
        %s204 = scalar_lea.vmem [#allocation3], %s203
        // Predicated region
        $region37: #{tpu_custom_call.1} parent=35 // pred_check
          %p205 = pneg %p43
        $region38: #{tpu_custom_call.1} parent=35 // pred_check_branch
          %207 = sbr.rel (%p205) target = $region40
        $region39: #{tpu_custom_call.1} parent=35 // pred_region
          %209 = dma.done %s201, 512
        $region40: #{tpu_custom_call.1} parent=35 // pred_fallthru
          _
        // Predicated region
        $region41: #{tpu_custom_call.1} parent=35 // pred_check
          %p210 = pneg %p64
        $region42: #{tpu_custom_call.1} parent=35 // pred_check_branch
          %212 = sbr.rel (%p210) target = $region44
        $region43: #{tpu_custom_call.1} parent=35 // pred_region
          %214 = dma.done [#allocation7], 2048
        $region44: #{tpu_custom_call.1} parent=35 // pred_fallthru
          _
        %s215 = sand.u32 %s30, 1
        %s216 = scalar_lea.sflag [#allocation4], %s215
        %s217 = sand.u32 %s30, 1
        %s218 = smul.addr %s217, 32
        %s219 = scalar_lea.vmem [#allocation3], %s218
        %p220 = pneg %p43
        %p221 = pneg %p40
        %p222 = pneg %p64
        %p223 = pneg %p61
        %p224 = pneg %p85
        %p225 = pneg %p82
        %p226 = pneg %p106
        %p227 = pneg %p103
        %p228 = pneg %p132
        %p229 = pneg %p129
        %s230 = sand.u32 %s119, 1
        %s231 = scalar_lea.sflag [#allocation5], %s230
        %s232 = sand.u32 %s119, 1
        %s233 = smul.addr %s232, 64
        %s234 = scalar_lea.vmem [#allocation8], %s233
        %s235 = smul.u32 8, %s22
        %s236 = smul.u32 8, %s22
        %v238 = vld [vmem:[%s204] sm:$0xf]
        %v239 = vld [vmem:[%s204 + $0x4] sm:$0xf]
        %v240 = vld [vmem:[%s204 + $0x8] sm:$0xf]
        %v241 = vld [vmem:[%s204 + $0xc] sm:$0xf]
        %v242 = vld [vmem:[%s204 + $0x10] sm:$0xf]
        %v243 = vld [vmem:[%s204 + $0x14] sm:$0xf]
        %v244 = vld [vmem:[%s204 + $0x18] sm:$0xf]
        %v245 = vld [vmem:[%s204 + $0x1c] sm:$0xf]
        %246 = vst [vmem:[#allocation2] sm:$0xf] %v238
        %247 = vst [vmem:[#allocation2 + $0x4] sm:$0xf] %v239
        %248 = vst [vmem:[#allocation2 + $0x8] sm:$0xf] %v240
        %249 = vst [vmem:[#allocation2 + $0xc] sm:$0xf] %v241
        %250 = vst [vmem:[#allocation2 + $0x10] sm:$0xf] %v242
        %251 = vst [vmem:[#allocation2 + $0x14] sm:$0xf] %v243
        %252 = vst [vmem:[#allocation2 + $0x18] sm:$0xf] %v244
        %253 = vst [vmem:[#allocation2 + $0x1c] sm:$0xf] %v245
        %v254 = vunpack.c.l.bf16 %v238
        %v255 = vunpack.c.l.bf16 %v239
        %v256 = vunpack.c.l.bf16 %v240
        %v257 = vunpack.c.l.bf16 %v241
        %v258 = vunpack.c.l.bf16 %v242
        %v259 = vunpack.c.l.bf16 %v243
        %v260 = vunpack.c.l.bf16 %v244
        %v261 = vunpack.c.l.bf16 %v245
        %v262 = vld [vmem:[#allocation6] sm:$0xf]
        %v263 = vld [vmem:[#allocation6 + $0x4] sm:$0xf]
        %v264 = vld [vmem:[#allocation6 + $0x8] sm:$0xf]
        %v265 = vld [vmem:[#allocation6 + $0xc] sm:$0xf]
        %v266 = vld [vmem:[#allocation6 + $0x10] sm:$0xf]
        %v267 = vld [vmem:[#allocation6 + $0x14] sm:$0xf]
        %v268 = vld [vmem:[#allocation6 + $0x18] sm:$0xf]
        %v269 = vld [vmem:[#allocation6 + $0x1c] sm:$0xf]
        %v270 = vld [vmem:[#allocation6 + $0x20] sm:$0xf]
        %v271 = vld [vmem:[#allocation6 + $0x24] sm:$0xf]
        %v272 = vld [vmem:[#allocation6 + $0x28] sm:$0xf]
        %v273 = vld [vmem:[#allocation6 + $0x2c] sm:$0xf]
        %v274 = vld [vmem:[#allocation6 + $0x30] sm:$0xf]
        %v275 = vld [vmem:[#allocation6 + $0x34] sm:$0xf]
        %v276 = vld [vmem:[#allocation6 + $0x38] sm:$0xf]
        %v277 = vld [vmem:[#allocation6 + $0x3c] sm:$0xf]
        %v286 = vunpack.c.l.b16 %v238
        %v287 = vunpack.c.l.b16 %v239
        %v288 = vunpack.c.l.b16 %v240
        %v289 = vunpack.c.l.b16 %v241
        %v290 = vunpack.c.l.b16 %v242
        %v291 = vunpack.c.l.b16 %v243
        %v292 = vunpack.c.l.b16 %v244
        %v293 = vunpack.c.l.b16 %v245
        %v294 = vpack.c.b16 %v287, %v286
        %v295 = vpack.c.b16 %v289, %v288
        %v296 = vpack.c.b16 %v291, %v290
        %v297 = vpack.c.b16 %v293, %v292
        %v318 = vunpack.c.l.b16 %v262
        %v319 = vunpack.c.l.b16 %v263
        %v320 = vunpack.c.l.b16 %v264
        %v321 = vunpack.c.l.b16 %v265
        %v322 = vunpack.c.l.b16 %v266
        %v323 = vunpack.c.l.b16 %v267
        %v324 = vunpack.c.l.b16 %v268
        %v325 = vunpack.c.l.b16 %v269
        %v326 = vunpack.c.l.b16 %v270
        %v327 = vunpack.c.l.b16 %v271
        %v328 = vunpack.c.l.b16 %v272
        %v329 = vunpack.c.l.b16 %v273
        %v330 = vunpack.c.l.b16 %v274
        %v331 = vunpack.c.l.b16 %v275
        %v332 = vunpack.c.l.b16 %v276
        %v333 = vunpack.c.l.b16 %v277
        %v334 = vpack.c.b16 %v319, %v318
        %v335 = vpack.c.b16 %v321, %v320
        %v336 = vpack.c.b16 %v323, %v322
        %v337 = vpack.c.b16 %v325, %v324
        %v338 = vpack.c.b16 %v327, %v326
        %v339 = vpack.c.b16 %v329, %v328
        %v340 = vpack.c.b16 %v331, %v330
        %v341 = vpack.c.b16 %v333, %v332
        %350 = vmatpush.bf16.msra.mxu0 %v341
        %351 = vmatpush.bf16.msra.mxu0 %v340
        %352 = vmatpush.bf16.msra.mxu0 %v339
        %353 = vmatpush.bf16.msra.mxu0 %v338
        %354 = vmatpush.bf16.msra.mxu0 %v337
        %355 = vmatpush.bf16.msra.mxu0 %v336
        %356 = vmatpush.bf16.msra.mxu0 %v335
        %357 = vmatpush.bf16.msra.mxu0 %v334
        %358 = vmatmul.bf16.gmra.mxu0 %v294
        %v359 = vpop.f32.mrf.mxu0
        %v360 = vadd.f32 0.0, %v359
        %v361 = vpop.f32.mrf.mxu0
        %v362 = vadd.f32 0.0, %v361
        %363 = vmatmul.bf16.gmra.mxu0 %v295
        %v364 = vpop.f32.mrf.mxu0
        %v365 = vadd.f32 0.0, %v364
        %v366 = vpop.f32.mrf.mxu0
        %v367 = vadd.f32 0.0, %v366
        %368 = vmatmul.bf16.gmra.mxu0 %v296
        %v369 = vpop.f32.mrf.mxu0
        %v370 = vadd.f32 0.0, %v369
        %v371 = vpop.f32.mrf.mxu0
        %v372 = vadd.f32 0.0, %v371
        %373 = vmatmul.bf16.gmra.mxu0 %v297
        %v374 = vpop.f32.mrf.mxu0
        %v375 = vadd.f32 0.0, %v374
        %v376 = vpop.f32.mrf.mxu0
        %v377 = vadd.f32 0.0, %v376
        %378 = vdwg.mxu0
        %v379 = vpack.c.bf16 %v360, %v360
        %v380 = vpack.c.bf16 %v362, %v362
        %v381 = vpack.c.bf16 %v365, %v365
        %v382 = vpack.c.bf16 %v367, %v367
        %v383 = vpack.c.bf16 %v370, %v370
        %v384 = vpack.c.bf16 %v372, %v372
        %v385 = vpack.c.bf16 %v375, %v375
        %v386 = vpack.c.bf16 %v377, %v377
        %s387 = scalar_lea.vmem [#allocation2], 32
        %388 = vst [vmem:[%s387] sm:$0xf] %v379
        %389 = vst [vmem:[%s387 + $0x4] sm:$0xf] %v380
        %390 = vst [vmem:[%s387 + $0x8] sm:$0xf] %v381
        %391 = vst [vmem:[%s387 + $0xc] sm:$0xf] %v382
        %392 = vst [vmem:[%s387 + $0x10] sm:$0xf] %v383
        %393 = vst [vmem:[%s387 + $0x14] sm:$0xf] %v384
        %394 = vst [vmem:[%s387 + $0x18] sm:$0xf] %v385
        %395 = vst [vmem:[%s387 + $0x1c] sm:$0xf] %v386
        %v404 = vunpack.c.l.b16 %v379
        %v405 = vunpack.c.l.b16 %v380
        %v406 = vunpack.c.l.b16 %v381
        %v407 = vunpack.c.l.b16 %v382
        %v408 = vunpack.c.l.b16 %v383
        %v409 = vunpack.c.l.b16 %v384
        %v410 = vunpack.c.l.b16 %v385
        %v411 = vunpack.c.l.b16 %v386
        %v412 = vpack.c.b16 %v405, %v404
        %v413 = vpack.c.b16 %v407, %v406
        %v414 = vpack.c.b16 %v409, %v408
        %v415 = vpack.c.b16 %v411, %v410
        %420 = vmatpush.bf16.msra.mxu0 %v341
        %421 = vmatpush.bf16.msra.mxu0 %v340
        %422 = vmatpush.bf16.msra.mxu0 %v339
        %423 = vmatpush.bf16.msra.mxu0 %v338
        %424 = vmatpush.bf16.msra.mxu0 %v337
        %425 = vmatpush.bf16.msra.mxu0 %v336
        %426 = vmatpush.bf16.msra.mxu0 %v335
        %427 = vmatpush.bf16.msra.mxu0 %v334
        %428 = vmatmul.bf16.gmra.mxu0 %v412
        %v429 = vpop.f32.mrf.mxu0
        %v430 = vadd.f32 0.0, %v429
        %v431 = vpop.f32.mrf.mxu0
        %v432 = vadd.f32 0.0, %v431
        %433 = vmatmul.bf16.gmra.mxu0 %v413
        %v434 = vpop.f32.mrf.mxu0
        %v435 = vadd.f32 0.0, %v434
        %v436 = vpop.f32.mrf.mxu0
        %v437 = vadd.f32 0.0, %v436
        %438 = vmatmul.bf16.gmra.mxu0 %v414
        %v439 = vpop.f32.mrf.mxu0
        %v440 = vadd.f32 0.0, %v439
        %v441 = vpop.f32.mrf.mxu0
        %v442 = vadd.f32 0.0, %v441
        %443 = vmatmul.bf16.gmra.mxu0 %v415
        %v444 = vpop.f32.mrf.mxu0
        %v445 = vadd.f32 0.0, %v444
        %v446 = vpop.f32.mrf.mxu0
        %v447 = vadd.f32 0.0, %v446
        %448 = vdwg.mxu0
        %v449 = vmul.f32 %v430, 2.0
        %v450 = vmul.f32 %v432, 2.0
        %v451 = vmul.f32 %v435, 2.0
        %v452 = vmul.f32 %v437, 2.0
        %v453 = vmul.f32 %v440, 2.0
        %v454 = vmul.f32 %v442, 2.0
        %v455 = vmul.f32 %v445, 2.0
        %v456 = vmul.f32 %v447, 2.0
        %v457 = vsub.f32 %v449, %v254
        %v458 = vsub.f32 %v450, %v255
        %v459 = vsub.f32 %v451, %v256
        %v460 = vsub.f32 %v452, %v257
        %v461 = vsub.f32 %v453, %v258
        %v462 = vsub.f32 %v454, %v259
        %v463 = vsub.f32 %v455, %v260
        %v464 = vsub.f32 %v456, %v261
        %v465 = vpack.c.bf16 %v457, %v457
        %v466 = vpack.c.bf16 %v458, %v458
        %v467 = vpack.c.bf16 %v459, %v459
        %v468 = vpack.c.bf16 %v460, %v460
        %v469 = vpack.c.bf16 %v461, %v461
        %v470 = vpack.c.bf16 %v462, %v462
        %v471 = vpack.c.bf16 %v463, %v463
        %v472 = vpack.c.bf16 %v464, %v464
        %s473 = scalar_lea.vmem [#allocation2], 64
        %474 = vst [vmem:[%s473] sm:$0xf] %v465
        %475 = vst [vmem:[%s473 + $0x4] sm:$0xf] %v466
        %476 = vst [vmem:[%s473 + $0x8] sm:$0xf] %v467
        %477 = vst [vmem:[%s473 + $0xc] sm:$0xf] %v468
        %478 = vst [vmem:[%s473 + $0x10] sm:$0xf] %v469
        %479 = vst [vmem:[%s473 + $0x14] sm:$0xf] %v470
        %480 = vst [vmem:[%s473 + $0x18] sm:$0xf] %v471
        %481 = vst [vmem:[%s473 + $0x1c] sm:$0xf] %v472
        %s482 = scalar_lea.vmem [#allocation6], 64
        %v483 = vld [vmem:[%s482] sm:$0xf]
        %v484 = vld [vmem:[%s482 + $0x4] sm:$0xf]
        %v485 = vld [vmem:[%s482 + $0x8] sm:$0xf]
        %v486 = vld [vmem:[%s482 + $0xc] sm:$0xf]
        %v487 = vld [vmem:[%s482 + $0x10] sm:$0xf]
        %v488 = vld [vmem:[%s482 + $0x14] sm:$0xf]
        %v489 = vld [vmem:[%s482 + $0x18] sm:$0xf]
        %v490 = vld [vmem:[%s482 + $0x1c] sm:$0xf]
        %v491 = vld [vmem:[%s482 + $0x20] sm:$0xf]
        %v492 = vld [vmem:[%s482 + $0x24] sm:$0xf]
        %v493 = vld [vmem:[%s482 + $0x28] sm:$0xf]
        %v494 = vld [vmem:[%s482 + $0x2c] sm:$0xf]
        %v495 = vld [vmem:[%s482 + $0x30] sm:$0xf]
        %v496 = vld [vmem:[%s482 + $0x34] sm:$0xf]
        %v497 = vld [vmem:[%s482 + $0x38] sm:$0xf]
        %v498 = vld [vmem:[%s482 + $0x3c] sm:$0xf]
        %v515 = vunpack.c.l.b16 %v483
        %v516 = vunpack.c.l.b16 %v484
        %v517 = vunpack.c.l.b16 %v485
        %v518 = vunpack.c.l.b16 %v486
        %v519 = vunpack.c.l.b16 %v487
        %v520 = vunpack.c.l.b16 %v488
        %v521 = vunpack.c.l.b16 %v489
        %v522 = vunpack.c.l.b16 %v490
        %v523 = vunpack.c.l.b16 %v491
        %v524 = vunpack.c.l.b16 %v492
        %v525 = vunpack.c.l.b16 %v493
        %v526 = vunpack.c.l.b16 %v494
        %v527 = vunpack.c.l.b16 %v495
        %v528 = vunpack.c.l.b16 %v496
        %v529 = vunpack.c.l.b16 %v497
        %v530 = vunpack.c.l.b16 %v498
        %v531 = vpack.c.b16 %v516, %v515
        %v532 = vpack.c.b16 %v518, %v517
        %v533 = vpack.c.b16 %v520, %v519
        %v534 = vpack.c.b16 %v522, %v521
        %v535 = vpack.c.b16 %v524, %v523
        %v536 = vpack.c.b16 %v526, %v525
        %v537 = vpack.c.b16 %v528, %v527
        %v538 = vpack.c.b16 %v530, %v529
        %547 = vmatpush.bf16.msra.mxu0 %v538
        %548 = vmatpush.bf16.msra.mxu0 %v537
        %549 = vmatpush.bf16.msra.mxu0 %v536
        %550 = vmatpush.bf16.msra.mxu0 %v535
        %551 = vmatpush.bf16.msra.mxu0 %v534
        %552 = vmatpush.bf16.msra.mxu0 %v533
        %553 = vmatpush.bf16.msra.mxu0 %v532
        %554 = vmatpush.bf16.msra.mxu0 %v531
        %555 = vmatmul.bf16.gmra.mxu0 %v294
        %v556 = vpop.f32.mrf.mxu0
        %v557 = vadd.f32 0.0, %v556
        %v558 = vpop.f32.mrf.mxu0
        %v559 = vadd.f32 0.0, %v558
        %560 = vmatmul.bf16.gmra.mxu0 %v295
        %v561 = vpop.f32.mrf.mxu0
        %v562 = vadd.f32 0.0, %v561
        %v563 = vpop.f32.mrf.mxu0
        %v564 = vadd.f32 0.0, %v563
        %565 = vmatmul.bf16.gmra.mxu0 %v296
        %v566 = vpop.f32.mrf.mxu0
        %v567 = vadd.f32 0.0, %v566
        %v568 = vpop.f32.mrf.mxu0
        %v569 = vadd.f32 0.0, %v568
        %570 = vmatmul.bf16.gmra.mxu0 %v297
        %v571 = vpop.f32.mrf.mxu0
        %v572 = vadd.f32 0.0, %v571
        %v573 = vpop.f32.mrf.mxu0
        %v574 = vadd.f32 0.0, %v573
        %575 = vdwg.mxu0
        %v576 = vpack.c.bf16 %v557, %v557
        %v577 = vpack.c.bf16 %v559, %v559
        %v578 = vpack.c.bf16 %v562, %v562
        %v579 = vpack.c.bf16 %v564, %v564
        %v580 = vpack.c.bf16 %v567, %v567
        %v581 = vpack.c.bf16 %v569, %v569
        %v582 = vpack.c.bf16 %v572, %v572
        %v583 = vpack.c.bf16 %v574, %v574
        %s584 = scalar_lea.vmem [#allocation2], 96
        %585 = vst [vmem:[%s584] sm:$0xf] %v576
        %586 = vst [vmem:[%s584 + $0x4] sm:$0xf] %v577
        %587 = vst [vmem:[%s584 + $0x8] sm:$0xf] %v578
        %588 = vst [vmem:[%s584 + $0xc] sm:$0xf] %v579
        %589 = vst [vmem:[%s584 + $0x10] sm:$0xf] %v580
        %590 = vst [vmem:[%s584 + $0x14] sm:$0xf] %v581
        %591 = vst [vmem:[%s584 + $0x18] sm:$0xf] %v582
        %592 = vst [vmem:[%s584 + $0x1c] sm:$0xf] %v583
        %v601 = vunpack.c.l.b16 %v576
        %v602 = vunpack.c.l.b16 %v577
        %v603 = vunpack.c.l.b16 %v578
        %v604 = vunpack.c.l.b16 %v579
        %v605 = vunpack.c.l.b16 %v580
        %v606 = vunpack.c.l.b16 %v581
        %v607 = vunpack.c.l.b16 %v582
        %v608 = vunpack.c.l.b16 %v583
        %v609 = vpack.c.b16 %v602, %v601
        %v610 = vpack.c.b16 %v604, %v603
        %v611 = vpack.c.b16 %v606, %v605
        %v612 = vpack.c.b16 %v608, %v607
        %617 = vmatpush.bf16.msra.mxu0 %v538
        %618 = vmatpush.bf16.msra.mxu0 %v537
        %619 = vmatpush.bf16.msra.mxu0 %v536
        %620 = vmatpush.bf16.msra.mxu0 %v535
        %621 = vmatpush.bf16.msra.mxu0 %v534
        %622 = vmatpush.bf16.msra.mxu0 %v533
        %623 = vmatpush.bf16.msra.mxu0 %v532
        %624 = vmatpush.bf16.msra.mxu0 %v531
        %625 = vmatmul.bf16.gmra.mxu0 %v609
        %v626 = vpop.f32.mrf.mxu0
        %v627 = vadd.f32 0.0, %v626
        %v628 = vpop.f32.mrf.mxu0
        %v629 = vadd.f32 0.0, %v628
        %630 = vmatmul.bf16.gmra.mxu0 %v610
        %v631 = vpop.f32.mrf.mxu0
        %v632 = vadd.f32 0.0, %v631
        %v633 = vpop.f32.mrf.mxu0
        %v634 = vadd.f32 0.0, %v633
        %635 = vmatmul.bf16.gmra.mxu0 %v611
        %v636 = vpop.f32.mrf.mxu0
        %v637 = vadd.f32 0.0, %v636
        %v638 = vpop.f32.mrf.mxu0
        %v639 = vadd.f32 0.0, %v638
        %640 = vmatmul.bf16.gmra.mxu0 %v612
        %v641 = vpop.f32.mrf.mxu0
        %v642 = vadd.f32 0.0, %v641
        %v643 = vpop.f32.mrf.mxu0
        %v644 = vadd.f32 0.0, %v643
        %645 = vdwg.mxu0
        %v646 = vmul.f32 %v627, 2.0
        %v647 = vmul.f32 %v629, 2.0
        %v648 = vmul.f32 %v632, 2.0
        %v649 = vmul.f32 %v634, 2.0
        %v650 = vmul.f32 %v637, 2.0
        %v651 = vmul.f32 %v639, 2.0
        %v652 = vmul.f32 %v642, 2.0
        %v653 = vmul.f32 %v644, 2.0
        %v654 = vsub.f32 %v646, %v254
        %v655 = vsub.f32 %v647, %v255
        %v656 = vsub.f32 %v648, %v256
        %v657 = vsub.f32 %v649, %v257
        %v658 = vsub.f32 %v650, %v258
        %v659 = vsub.f32 %v651, %v259
        %v660 = vsub.f32 %v652, %v260
        %v661 = vsub.f32 %v653, %v261
        %v662 = vpack.c.bf16 %v654, %v654
        %v663 = vpack.c.bf16 %v655, %v655
        %v664 = vpack.c.bf16 %v656, %v656
        %v665 = vpack.c.bf16 %v657, %v657
        %v666 = vpack.c.bf16 %v658, %v658
        %v667 = vpack.c.bf16 %v659, %v659
        %v668 = vpack.c.bf16 %v660, %v660
        %v669 = vpack.c.bf16 %v661, %v661
        %s670 = scalar_lea.vmem [#allocation2], 128
        %671 = vst [vmem:[%s670] sm:$0xf] %v662
        %672 = vst [vmem:[%s670 + $0x4] sm:$0xf] %v663
        %673 = vst [vmem:[%s670 + $0x8] sm:$0xf] %v664
        %674 = vst [vmem:[%s670 + $0xc] sm:$0xf] %v665
        %675 = vst [vmem:[%s670 + $0x10] sm:$0xf] %v666
        %676 = vst [vmem:[%s670 + $0x14] sm:$0xf] %v667
        %677 = vst [vmem:[%s670 + $0x18] sm:$0xf] %v668
        %678 = vst [vmem:[%s670 + $0x1c] sm:$0xf] %v669
        %v679 = vld [vmem:[%s2] sm:$0xf]
        %v680 = vld [vmem:[%s3] sm:$0xff]
        %v681 = vld [vmem:[#allocation2] sm:$0xf]
        %v682 = vld [vmem:[#allocation2 + $0x20] sm:$0xf]
        %v683 = vld [vmem:[#allocation2 + $0x40] sm:$0xf]
        %v684 = vld [vmem:[#allocation2 + $0x60] sm:$0xf]
        %v685 = vld [vmem:[#allocation2 + $0x80] sm:$0xf]
        %687 = vset.pattern.permute.xlu0 0
        %688 = vperm.xlu0 %687, %v680
        %v689 = vpop.permute.xlu0 %688
        %v696 = vunpack.c.l.b16 %v681
        %v697 = vunpack.c.l.b16 %v682
        %v698 = vunpack.c.l.b16 %v683
        %v699 = vunpack.c.l.b16 %v684
        %v700 = vunpack.c.l.b16 %v685
        %v701 = vpack.c.b16 %v697, %v696
        %v702 = vpack.c.b16 %v699, %v698
        %v703 = vpack.c.b16 %v700, %v700
        %vm706 = vcmask 326656
        %v708 = vsel %vm706, %v679, 0
        %vm710 = vcmask 1043456
        %v712 = vsel %vm710, %v703, 0
        %714 = vmatpush.bf16.msra.mxu0 0
        %715 = vmatpush.bf16.msra.mxu0 0
        %716 = vmatpush.bf16.msra.mxu0 0
        %717 = vmatpush.bf16.msra.mxu0 0
        %718 = vmatpush.bf16.msra.mxu0 0
        %719 = vmatpush.bf16.msra.mxu0 %v712
        %720 = vmatpush.bf16.msra.mxu0 %v702
        %721 = vmatpush.bf16.msra.mxu0 %v701
        %722 = vmatmul.bf16.gmra.mxu0 %v708
        %v723 = vpop.f32.mrf.mxu0
        %v724 = vadd.f32 %v689, %v723
        %v725 = vpop.f32.mrf.mxu0
        %726 = vdwg.mxu0
        %727 = vst [vmem:[%s234] sm:$0xff] %v724
        %v728 = vld [vmem:[#allocation2 + $0x4] sm:$0xf]
        %v729 = vld [vmem:[#allocation2 + $0x24] sm:$0xf]
        %v730 = vld [vmem:[#allocation2 + $0x44] sm:$0xf]
        %v731 = vld [vmem:[#allocation2 + $0x64] sm:$0xf]
        %v732 = vld [vmem:[#allocation2 + $0x84] sm:$0xf]
        %v738 = vunpack.c.l.b16 %v728
        %v739 = vunpack.c.l.b16 %v729
        %v740 = vunpack.c.l.b16 %v730
        %v741 = vunpack.c.l.b16 %v731
        %v742 = vunpack.c.l.b16 %v732
        %v743 = vpack.c.b16 %v739, %v738
        %v744 = vpack.c.b16 %v741, %v740
        %v745 = vpack.c.b16 %v742, %v742
        %v749 = vsel %vm710, %v745, 0
        %751 = vmatpush.bf16.msra.mxu0 0
        %752 = vmatpush.bf16.msra.mxu0 0
        %753 = vmatpush.bf16.msra.mxu0 0
        %754 = vmatpush.bf16.msra.mxu0 0
        %755 = vmatpush.bf16.msra.mxu0 0
        %756 = vmatpush.bf16.msra.mxu0 %v749
        %757 = vmatpush.bf16.msra.mxu0 %v744
        %758 = vmatpush.bf16.msra.mxu0 %v743
        %759 = vmatmul.bf16.gmra.mxu0 %v708
        %v760 = vpop.f32.mrf.mxu0
        %v761 = vadd.f32 %v689, %v760
        %v762 = vpop.f32.mrf.mxu0
        %763 = vdwg.mxu0
        %s764 = scalar_lea.vmem %s234, 8 [#allocation8]
        %765 = vst [vmem:[%s764] sm:$0xff] %v761
        %v766 = vld [vmem:[#allocation2 + $0x8] sm:$0xf]
        %v767 = vld [vmem:[#allocation2 + $0x28] sm:$0xf]
        %v768 = vld [vmem:[#allocation2 + $0x48] sm:$0xf]
        %v769 = vld [vmem:[#allocation2 + $0x68] sm:$0xf]
        %v770 = vld [vmem:[#allocation2 + $0x88] sm:$0xf]
        %v776 = vunpack.c.l.b16 %v766
        %v777 = vunpack.c.l.b16 %v767
        %v778 = vunpack.c.l.b16 %v768
        %v779 = vunpack.c.l.b16 %v769
        %v780 = vunpack.c.l.b16 %v770
        %v781 = vpack.c.b16 %v777, %v776
        %v782 = vpack.c.b16 %v779, %v778
        %v783 = vpack.c.b16 %v780, %v780
        %v787 = vsel %vm710, %v783, 0
        %789 = vmatpush.bf16.msra.mxu0 0
        %790 = vmatpush.bf16.msra.mxu0 0
        %791 = vmatpush.bf16.msra.mxu0 0
        %792 = vmatpush.bf16.msra.mxu0 0
        %793 = vmatpush.bf16.msra.mxu0 0
        %794 = vmatpush.bf16.msra.mxu0 %v787
        %795 = vmatpush.bf16.msra.mxu0 %v782
        %796 = vmatpush.bf16.msra.mxu0 %v781
        %797 = vmatmul.bf16.gmra.mxu0 %v708
        %v798 = vpop.f32.mrf.mxu0
        %v799 = vadd.f32 %v689, %v798
        %v800 = vpop.f32.mrf.mxu0
        %801 = vdwg.mxu0
        %s802 = scalar_lea.vmem %s234, 16 [#allocation8]
        %803 = vst [vmem:[%s802] sm:$0xff] %v799
        %v804 = vld [vmem:[#allocation2 + $0xc] sm:$0xf]
        %v805 = vld [vmem:[#allocation2 + $0x2c] sm:$0xf]
        %v806 = vld [vmem:[#allocation2 + $0x4c] sm:$0xf]
        %v807 = vld [vmem:[#allocation2 + $0x6c] sm:$0xf]
        %v808 = vld [vmem:[#allocation2 + $0x8c] sm:$0xf]
        %v814 = vunpack.c.l.b16 %v804
        %v815 = vunpack.c.l.b16 %v805
        %v816 = vunpack.c.l.b16 %v806
        %v817 = vunpack.c.l.b16 %v807
        %v818 = vunpack.c.l.b16 %v808
        %v819 = vpack.c.b16 %v815, %v814
        %v820 = vpack.c.b16 %v817, %v816
        %v821 = vpack.c.b16 %v818, %v818
        %v825 = vsel %vm710, %v821, 0
        %827 = vmatpush.bf16.msra.mxu0 0
        %828 = vmatpush.bf16.msra.mxu0 0
        %829 = vmatpush.bf16.msra.mxu0 0
        %830 = vmatpush.bf16.msra.mxu0 0
        %831 = vmatpush.bf16.msra.mxu0 0
        %832 = vmatpush.bf16.msra.mxu0 %v825
        %833 = vmatpush.bf16.msra.mxu0 %v820
        %834 = vmatpush.bf16.msra.mxu0 %v819
        %835 = vmatmul.bf16.gmra.mxu0 %v708
        %v836 = vpop.f32.mrf.mxu0
        %v837 = vadd.f32 %v689, %v836
        %v838 = vpop.f32.mrf.mxu0
        %839 = vdwg.mxu0
        %s840 = scalar_lea.vmem %s234, 24 [#allocation8]
        %841 = vst [vmem:[%s840] sm:$0xff] %v837
        %v842 = vld [vmem:[#allocation2 + $0x10] sm:$0xf]
        %v843 = vld [vmem:[#allocation2 + $0x30] sm:$0xf]
        %v844 = vld [vmem:[#allocation2 + $0x50] sm:$0xf]
        %v845 = vld [vmem:[#allocation2 + $0x70] sm:$0xf]
        %v846 = vld [vmem:[#allocation2 + $0x90] sm:$0xf]
        %v852 = vunpack.c.l.b16 %v842
        %v853 = vunpack.c.l.b16 %v843
        %v854 = vunpack.c.l.b16 %v844
        %v855 = vunpack.c.l.b16 %v845
        %v856 = vunpack.c.l.b16 %v846
        %v857 = vpack.c.b16 %v853, %v852
        %v858 = vpack.c.b16 %v855, %v854
        %v859 = vpack.c.b16 %v856, %v856
        %v863 = vsel %vm710, %v859, 0
        %865 = vmatpush.bf16.msra.mxu0 0
        %866 = vmatpush.bf16.msra.mxu0 0
        %867 = vmatpush.bf16.msra.mxu0 0
        %868 = vmatpush.bf16.msra.mxu0 0
        %869 = vmatpush.bf16.msra.mxu0 0
        %870 = vmatpush.bf16.msra.mxu0 %v863
        %871 = vmatpush.bf16.msra.mxu0 %v858
        %872 = vmatpush.bf16.msra.mxu0 %v857
        %873 = vmatmul.bf16.gmra.mxu0 %v708
        %v874 = vpop.f32.mrf.mxu0
        %v875 = vadd.f32 %v689, %v874
        %v876 = vpop.f32.mrf.mxu0
        %877 = vdwg.mxu0
        %s878 = scalar_lea.vmem %s234, 32 [#allocation8]
        %879 = vst [vmem:[%s878] sm:$0xff] %v875
        %v880 = vld [vmem:[#allocation2 + $0x14] sm:$0xf]
        %v881 = vld [vmem:[#allocation2 + $0x34] sm:$0xf]
        %v882 = vld [vmem:[#allocation2 + $0x54] sm:$0xf]
        %v883 = vld [vmem:[#allocation2 + $0x74] sm:$0xf]
        %v884 = vld [vmem:[#allocation2 + $0x94] sm:$0xf]
        %v890 = vunpack.c.l.b16 %v880
        %v891 = vunpack.c.l.b16 %v881
        %v892 = vunpack.c.l.b16 %v882
        %v893 = vunpack.c.l.b16 %v883
        %v894 = vunpack.c.l.b16 %v884
        %v895 = vpack.c.b16 %v891, %v890
        %v896 = vpack.c.b16 %v893, %v892
        %v897 = vpack.c.b16 %v894, %v894
        %v901 = vsel %vm710, %v897, 0
        %903 = vmatpush.bf16.msra.mxu0 0
        %904 = vmatpush.bf16.msra.mxu0 0
        %905 = vmatpush.bf16.msra.mxu0 0
        %906 = vmatpush.bf16.msra.mxu0 0
        %907 = vmatpush.bf16.msra.mxu0 0
        %908 = vmatpush.bf16.msra.mxu0 %v901
        %909 = vmatpush.bf16.msra.mxu0 %v896
        %910 = vmatpush.bf16.msra.mxu0 %v895
        %911 = vmatmul.bf16.gmra.mxu0 %v708
        %v912 = vpop.f32.mrf.mxu0
        %v913 = vadd.f32 %v689, %v912
        %v914 = vpop.f32.mrf.mxu0
        %915 = vdwg.mxu0
        %s916 = scalar_lea.vmem %s234, 40 [#allocation8]
        %917 = vst [vmem:[%s916] sm:$0xff] %v913
        %v918 = vld [vmem:[#allocation2 + $0x18] sm:$0xf]
        %v919 = vld [vmem:[#allocation2 + $0x38] sm:$0xf]
        %v920 = vld [vmem:[#allocation2 + $0x58] sm:$0xf]
        %v921 = vld [vmem:[#allocation2 + $0x78] sm:$0xf]
        %v922 = vld [vmem:[#allocation2 + $0x98] sm:$0xf]
        %v928 = vunpack.c.l.b16 %v918
        %v929 = vunpack.c.l.b16 %v919
        %v930 = vunpack.c.l.b16 %v920
        %v931 = vunpack.c.l.b16 %v921
        %v932 = vunpack.c.l.b16 %v922
        %v933 = vpack.c.b16 %v929, %v928
        %v934 = vpack.c.b16 %v931, %v930
        %v935 = vpack.c.b16 %v932, %v932
        %v939 = vsel %vm710, %v935, 0
        %941 = vmatpush.bf16.msra.mxu0 0
        %942 = vmatpush.bf16.msra.mxu0 0
        %943 = vmatpush.bf16.msra.mxu0 0
        %944 = vmatpush.bf16.msra.mxu0 0
        %945 = vmatpush.bf16.msra.mxu0 0
        %946 = vmatpush.bf16.msra.mxu0 %v939
        %947 = vmatpush.bf16.msra.mxu0 %v934
        %948 = vmatpush.bf16.msra.mxu0 %v933
        %949 = vmatmul.bf16.gmra.mxu0 %v708
        %v950 = vpop.f32.mrf.mxu0
        %v951 = vadd.f32 %v689, %v950
        %v952 = vpop.f32.mrf.mxu0
        %953 = vdwg.mxu0
        %s954 = scalar_lea.vmem %s234, 48 [#allocation8]
        %955 = vst [vmem:[%s954] sm:$0xff] %v951
        %v956 = vld [vmem:[#allocation2 + $0x1c] sm:$0xf]
        %v957 = vld [vmem:[#allocation2 + $0x3c] sm:$0xf]
        %v958 = vld [vmem:[#allocation2 + $0x5c] sm:$0xf]
        %v959 = vld [vmem:[#allocation2 + $0x7c] sm:$0xf]
        %v960 = vld [vmem:[#allocation2 + $0x9c] sm:$0xf]
        %v966 = vunpack.c.l.b16 %v956
        %v967 = vunpack.c.l.b16 %v957
        %v968 = vunpack.c.l.b16 %v958
        %v969 = vunpack.c.l.b16 %v959
        %v970 = vunpack.c.l.b16 %v960
        %v971 = vpack.c.b16 %v967, %v966
        %v972 = vpack.c.b16 %v969, %v968
        %v973 = vpack.c.b16 %v970, %v970
        %v977 = vsel %vm710, %v973, 0
        %979 = vmatpush.bf16.msra.mxu0 0
        %980 = vmatpush.bf16.msra.mxu0 0
        %981 = vmatpush.bf16.msra.mxu0 0
        %982 = vmatpush.bf16.msra.mxu0 0
        %983 = vmatpush.bf16.msra.mxu0 0
        %984 = vmatpush.bf16.msra.mxu0 %v977
        %985 = vmatpush.bf16.msra.mxu0 %v972
        %986 = vmatpush.bf16.msra.mxu0 %v971
        %987 = vmatmul.bf16.gmra.mxu0 %v708
        %v988 = vpop.f32.mrf.mxu0
        %v989 = vadd.f32 %v689, %v988
        %v990 = vpop.f32.mrf.mxu0
        %991 = vdwg.mxu0
        %s992 = scalar_lea.vmem %s234, 56 [#allocation8]
        %993 = vst [vmem:[%s992] sm:$0xff] %v989
        %s994 = sand.u32 %s119, 1
        %s995 = scalar_lea.sflag [#allocation5], %s994
        %s996 = sand.u32 %s119, 1
        %s997 = smul.addr %s996, 64
        %s998 = scalar_lea.vmem [#allocation8], %s997
        // Predicated region
        $region45: #{tpu_custom_call.1} parent=35 // pred_check
          %p999 = pneg %p129
        $region46: #{tpu_custom_call.1} parent=35 // pred_check_branch
          %1001 = sbr.rel (%p999) target = $region48
        $region47: #{tpu_custom_call.1} parent=35 // pred_region
          %s1002 = smul.u32 8, %s22
          %1004 = vsyncadd %s995, 0
          %s1005 = smul.addr %s1002, 8
          %s1006 = scalar_lea.hbm %s4, %s1005
          %s1007 = sshll.u32 %s998, 4
          %s1008 = int_to_ptr.vmem [resolvable:$true] %s1007
          %s1009 = sshll.u32 %s1006, 4
          %s1010 = int_to_ptr.hbm [resolvable:$true] %s1009
          %1015 = dma.vmem_to_hbm [thread:$0]  %s1008, 1024, %s1010, %s995, 128, 128, 8
        $region48: #{tpu_custom_call.1} parent=35 // pred_fallthru
          _
      $region36: #{tpu_custom_call.1} parent=5 // pred_fallthru
        _
      %p1016 = scmp.le.s32.totalorder 2, %s17
      // Predicated region
      $region49: #{tpu_custom_call.1} parent=5 // pred_check
        %p1017 = pneg %p1016
      $region50: #{tpu_custom_call.1} parent=5 // pred_check_branch
        %1019 = sbr.rel (%p1017) target = $region52
      $region51: #{tpu_custom_call.1} parent=5 // pred_region
        %s1020 = ssub.s32 %s17, 2
        // Predicated region
        $region53: #{tpu_custom_call.1} parent=51 // pred_check
          %p1021 = pneg %p135
        $region54: #{tpu_custom_call.1} parent=51 // pred_check_branch
          %1023 = sbr.rel (%p1021) target = $region56
        $region55: #{tpu_custom_call.1} parent=51 // pred_region
          %s1024 = sand.u32 %s120, 1
          %s1025 = scalar_lea.sflag [#allocation5], %s1024
          %s1026 = sand.u32 %s120, 1
          %s1027 = smul.addr %s1026, 64
          %s1028 = scalar_lea.vmem [#allocation8], %s1027
          %1030 = dma.done %s1025, 1024
        $region56: #{tpu_custom_call.1} parent=51 // pred_fallthru
          _
      $region52: #{tpu_custom_call.1} parent=5 // pred_fallthru
        _
    $region6: #{tpu_custom_call.1} parent=1 // loop_footer
      %s21 = sadd.s32 1, %s17
    $region7: #{tpu_custom_call.1} parent=1 // loop_footer_branch
      %16 = sbr.rel target = $region3
    $region8: #{tpu_custom_call.1} parent=1 // loop_exit
      _
    %1031 = vsyncpa [#allocation4], 1
    %s1032 = scalar_lea.sflag [#allocation4], 1
    %1033 = vsyncpa %s1032, 1
    %1034 = vsyncpa [#allocation7], 1
    %1035 = vsyncpa [#allocation5], 1
    %s1036 = scalar_lea.sflag [#allocation5], 1
    %1037 = vsyncpa %s1036, 1

</llo_original>
